<compile_context>
chip_gen: v7x
topology: tpu7x:2x2x1
jax: 0.10.0
libtpu: 0.0.40
codegen_flags: <defaults>
</compile_context>

<pallas_src>
import functools

import jax
import jax.numpy as jnp
from jax.experimental import pallas as pl
from jax.experimental.pallas import tpu as pltpu


def _round_up(x, m):
    return (x + m - 1) // m * m


# ---------------------------------------------------------------------------
# Fused kernel: all five Linear layers + ReLU/Tanh + reparameterization.
# ---------------------------------------------------------------------------
def _prior_kernel(dff, d_latent, x_ref, eps_ref, w1_ref, b1_ref, w23_ref,
                  b23_ref, w45_ref, b45_ref, z_ref, mu_ref, lv_ref):
    # x: (TB, dff) f32; weights bf16; biases f32 shaped (1, n).
    x = x_ref[...].astype(jnp.bfloat16)

    # hidden_layer + ReLU
    h = jnp.dot(x, w1_ref[...], preferred_element_type=jnp.float32)
    h = jnp.maximum(h + b1_ref[...], 0.0)

    # hidden_layer_mu | hidden_layer_logvar fused into one lane-dense matmul
    hml = jnp.dot(h.astype(jnp.bfloat16), w23_ref[...],
                  preferred_element_type=jnp.float32)
    hml = jnp.maximum(hml + b23_ref[...], 0.0).astype(jnp.bfloat16)

    # output_layer_mu | output_layer_logvar fused into one matmul + tanh.
    # hml is (TB, 2*dff); w45 is (2*dff, 2*d_latent) block-diagonal so
    #   out[:, :d_latent]  = h_mu  @ W_mu_out
    #   out[:, d_latent:]  = h_lv  @ W_lv_out
    out = jnp.dot(hml, w45_ref[...], preferred_element_type=jnp.float32)
    out = jnp.tanh(out + b45_ref[...])
    mu = out[:, :d_latent]          # 128-aligned lane split (free)
    lv = out[:, d_latent:]

    # reparameterization: z = mu + eps * exp(0.5 * logvar)   (exp -> EUP)
    z_ref[...] = mu + eps_ref[...] * jnp.exp(0.5 * lv)
    mu_ref[...] = mu
    lv_ref[...] = lv


# ---------------------------------------------------------------------------
# Wrapper
# ---------------------------------------------------------------------------
@functools.partial(jax.jit, static_argnames=("block_rows",))
def prior_network_forward(params, inp, eps, *, block_rows=256):
    dff = params["w1"].shape[0]
    d_latent = params["w4"].shape[1]

    lead = inp.shape[:-1]
    x2 = inp.reshape(-1, dff).astype(jnp.float32)
    e2 = eps.reshape(-1, d_latent).astype(jnp.float32)
    m = x2.shape[0]

    # Row tiling: sublane-aligned block, padded batch, 1-D parallel grid.
    tb = min(block_rows, _round_up(m, 8))
    m_pad = _round_up(m, tb)
    if m_pad != m:
        x2 = jnp.pad(x2, ((0, m_pad - m), (0, 0)))
        e2 = jnp.pad(e2, ((0, m_pad - m), (0, 0)))

    # Pre-pack weights: bf16 for the MXU.
    #   w23: hidden_mu | hidden_logvar side by side           (dff, 2*dff)
    #   w45: block-diagonal [out_mu, 0; 0, out_logvar]        (2*dff, 2*d_latent)
    w1 = params["w1"].astype(jnp.bfloat16)
    w23 = jnp.concatenate([params["w2"], params["w3"]], axis=1).astype(jnp.bfloat16)
    b23 = jnp.concatenate([params["b2"], params["b3"]], axis=1)
    zeros = jnp.zeros((dff, d_latent), jnp.float32)
    w45 = jnp.block([[params["w4"], zeros],
                     [zeros, params["w5"]]]).astype(jnp.bfloat16)
    b45 = jnp.concatenate([params["b4"], params["b5"]], axis=1)

    def row_spec(n):
        return pl.BlockSpec((tb, n), lambda i: (i, 0))

    def full_spec(shape):
        return pl.BlockSpec(shape, lambda i: (0, 0))

    grid = (m_pad // tb,)
    z, mu, lv = pl.pallas_call(
        functools.partial(_prior_kernel, dff, d_latent),
        out_shape=(
            jax.ShapeDtypeStruct((m_pad, d_latent), jnp.float32),
            jax.ShapeDtypeStruct((m_pad, d_latent), jnp.float32),
            jax.ShapeDtypeStruct((m_pad, d_latent), jnp.float32),
        ),
        grid_spec=pltpu.PrefetchScalarGridSpec(
            num_scalar_prefetch=0,
            grid=grid,
            in_specs=[
                row_spec(dff),                         # x rows
                row_spec(d_latent),                    # eps rows
                full_spec((dff, dff)),                 # w1
                full_spec((1, dff)),                   # b1
                full_spec((dff, 2 * dff)),             # w23
                full_spec((1, 2 * dff)),               # b23
                full_spec((2 * dff, 2 * d_latent)),    # w45 (block diag)
                full_spec((1, 2 * d_latent)),          # b45
            ],
            out_specs=(row_spec(d_latent), row_spec(d_latent), row_spec(d_latent)),
        ),
        compiler_params=pltpu.CompilerParams(
            dimension_semantics=("parallel",)),
    )(x2, e2, w1, params["b1"], w23, b23, w45, b45)

    out_shape = lead + (d_latent,)
    return (z[:m].reshape(out_shape),
            mu[:m].reshape(out_shape),
            lv[:m].reshape(out_shape))


# ---------------------------------------------------------------------------
# Parameters (synthetic, deterministic). Weights stored (in, out) so the
# kernel computes x @ W; loading real PyTorch weights requires transposing
# the (out, in) nn.Linear layout.
# ---------------------------------------------------------------------------
def init_params(key, dff=256, d_latent=256):
    ks = jax.random.split(key, 10)

    def lin(kw, kb, din, dout):
        w = jax.random.normal(kw, (din, dout), jnp.float32) * (1.0 / din ** 0.5)
        b = jax.random.normal(kb, (1, dout), jnp.float32) * 0.01
        return w, b

    w1, b1 = lin(ks[0], ks[1], dff, dff)        # hidden_layer
    w2, b2 = lin(ks[2], ks[3], dff, dff)        # hidden_layer_mu
    w3, b3 = lin(ks[4], ks[5], dff, dff)        # hidden_layer_logvar
    w4, b4 = lin(ks[6], ks[7], dff, d_latent)   # output_layer_mu
    w5, b5 = lin(ks[8], ks[9], dff, d_latent)   # output_layer_logvar
    return {"w1": w1, "b1": b1, "w2": w2, "b2": b2, "w3": w3, "b3": b3,
            "w4": w4, "b4": b4, "w5": w5, "b5": b5}


# Pure-JAX f32 reference (mirrors PriorNetwork.forward exactly).
def prior_network_ref(params, inp, eps):
    h = jax.nn.relu(inp @ params["w1"] + params["b1"])
    h_mu = jax.nn.relu(h @ params["w2"] + params["b2"])
    mu = jnp.tanh(h_mu @ params["w4"] + params["b4"])
    h_lv = jax.nn.relu(h @ params["w3"] + params["b3"])
    logvar = jnp.tanh(h_lv @ params["w5"] + params["b5"])
    z = mu + eps * jnp.exp(0.5 * logvar)
    return z, mu, logvar


if __name__ == "__main__":
    key = jax.random.PRNGKey(0)
    k_p, k_x, k_e = jax.random.split(key, 3)

    DFF = 256        # matches PriorNetwork defaults (dff=256, d_latent=256)
    D_LATENT = 256
    B, S = 2, 8      # small batch / sequence

    params = init_params(k_p, DFF, D_LATENT)
    inp = jax.random.normal(k_x, (B, S, DFF), jnp.float32)
    # torch.randn_like(std) -> drawn here and passed in so the kernel is pure.
    eps = jax.random.normal(k_e, (B, S, D_LATENT), jnp.float32)

    z, mu, logvar = prior_network_forward(params, inp, eps)
    jax.block_until_ready((z, mu, logvar))

    # Sanity check vs the f32 reference (bf16 matmuls -> loose tolerance).
    z_ref, mu_ref, lv_ref = prior_network_ref(params, inp, eps)
    for got, ref in ((z, z_ref), (mu, mu_ref), (logvar, lv_ref)):
        assert got.shape == ref.shape
        err = float(jnp.max(jnp.abs(got - ref)))
        assert err < 1e-1, f"max abs err {err}"

    assert z.shape == (B, S, D_LATENT)
    assert mu.shape == (B, S, D_LATENT) and logvar.shape == (B, S, D_LATENT)
    print("KERNEL_OK")
</pallas_src>

<mosaic_0001>
module attributes {stable_mosaic.version = 11 : i64} {
  func.func @_prior_kernel(%arg0: i32, %arg1: memref<16x256xf32, #tpu.memory_space<vmem>>, %arg2: memref<16x256xf32, #tpu.memory_space<vmem>>, %arg3: memref<256x256xbf16, #tpu.memory_space<vmem>>, %arg4: memref<1x256xf32, #tpu.memory_space<vmem>>, %arg5: memref<256x512xbf16, #tpu.memory_space<vmem>>, %arg6: memref<1x512xf32, #tpu.memory_space<vmem>>, %arg7: memref<512x512xbf16, #tpu.memory_space<vmem>>, %arg8: memref<1x512xf32, #tpu.memory_space<vmem>>, %arg9: memref<16x256xf32, #tpu.memory_space<vmem>>, %arg10: memref<16x256xf32, #tpu.memory_space<vmem>>, %arg11: memref<16x256xf32, #tpu.memory_space<vmem>>) attributes {dimension_semantics = [#tpu.dimension_semantics<parallel>], iteration_bounds = array<i64: 1>, scalar_prefetch = 0 : i64, scratch_operands = 0 : i64, tpu.core_type = #tpu.core_type<tc>, window_params = [{transform_indices = @transform_0, window_bounds = array<i64: 16, 256>}, {transform_indices = @transform_1, window_bounds = array<i64: 16, 256>}, {pipeline_mode = #tpu.pipeline_mode<synchronous>, transform_indices = @transform_2, window_bounds = array<i64: 256, 256>}, {pipeline_mode = #tpu.pipeline_mode<synchronous>, transform_indices = @transform_3, window_bounds = array<i64: 1, 256>}, {pipeline_mode = #tpu.pipeline_mode<synchronous>, transform_indices = @transform_4, window_bounds = array<i64: 256, 512>}, {pipeline_mode = #tpu.pipeline_mode<synchronous>, transform_indices = @transform_5, window_bounds = array<i64: 1, 512>}, {pipeline_mode = #tpu.pipeline_mode<synchronous>, transform_indices = @transform_6, window_bounds = array<i64: 512, 512>}, {pipeline_mode = #tpu.pipeline_mode<synchronous>, transform_indices = @transform_7, window_bounds = array<i64: 1, 512>}, {transform_indices = @transform_8, window_bounds = array<i64: 16, 256>}, {transform_indices = @transform_9, window_bounds = array<i64: 16, 256>}, {transform_indices = @transform_10, window_bounds = array<i64: 16, 256>}]} {
    %c0 = arith.constant 0 : index
    %c0_0 = arith.constant 0 : index
    %0 = vector.load %arg1[%c0, %c0_0] : memref<16x256xf32, #tpu.memory_space<vmem>>, vector<16x256xf32>
    %1 = arith.truncf %0 : vector<16x256xf32> to vector<16x256xbf16>
    %c0_1 = arith.constant 0 : index
    %c0_2 = arith.constant 0 : index
    %2 = vector.load %arg3[%c0_1, %c0_2] : memref<256x256xbf16, #tpu.memory_space<vmem>>, vector<256x256xbf16>
    %cst = arith.constant dense<0.000000e+00> : vector<16x256xf32>
    %3 = tpu.matmul %1, %2, %cst {dimension_numbers = #tpu.dot_dimension_numbers<[1], [0], [0], [1], [0, 0, 1, 1], [], []>} : vector<16x256xbf16>, vector<256x256xbf16>, vector<16x256xf32> -> vector<16x256xf32>
    %c0_3 = arith.constant 0 : index
    %c0_4 = arith.constant 0 : index
    %4 = vector.load %arg4[%c0_3, %c0_4] : memref<1x256xf32, #tpu.memory_space<vmem>>, vector<1x256xf32>
    %5 = vector.broadcast %4 : vector<1x256xf32> to vector<16x256xf32>
    %6 = arith.addf %3, %5 : vector<16x256xf32>
    %cst_5 = arith.constant 0.000000e+00 : f32
    %7 = vector.broadcast %cst_5 : f32 to vector<16x256xf32>
    %8 = arith.maximumf %6, %7 : vector<16x256xf32>
    %9 = arith.truncf %8 : vector<16x256xf32> to vector<16x256xbf16>
    %c0_6 = arith.constant 0 : index
    %c0_7 = arith.constant 0 : index
    %10 = vector.load %arg5[%c0_6, %c0_7] : memref<256x512xbf16, #tpu.memory_space<vmem>>, vector<256x512xbf16>
    %cst_8 = arith.constant dense<0.000000e+00> : vector<16x512xf32>
    %11 = tpu.matmul %9, %10, %cst_8 {dimension_numbers = #tpu.dot_dimension_numbers<[1], [0], [0], [1], [0, 0, 1, 1], [], []>} : vector<16x256xbf16>, vector<256x512xbf16>, vector<16x512xf32> -> vector<16x512xf32>
    %c0_9 = arith.constant 0 : index
    %c0_10 = arith.constant 0 : index
    %12 = vector.load %arg6[%c0_9, %c0_10] : memref<1x512xf32, #tpu.memory_space<vmem>>, vector<1x512xf32>
    %13 = vector.broadcast %12 : vector<1x512xf32> to vector<16x512xf32>
    %14 = arith.addf %11, %13 : vector<16x512xf32>
    %cst_11 = arith.constant 0.000000e+00 : f32
    %15 = vector.broadcast %cst_11 : f32 to vector<16x512xf32>
    %16 = arith.maximumf %14, %15 : vector<16x512xf32>
    %17 = arith.truncf %16 : vector<16x512xf32> to vector<16x512xbf16>
    %c0_12 = arith.constant 0 : index
    %c0_13 = arith.constant 0 : index
    %18 = vector.load %arg7[%c0_12, %c0_13] : memref<512x512xbf16, #tpu.memory_space<vmem>>, vector<512x512xbf16>
    %cst_14 = arith.constant dense<0.000000e+00> : vector<16x512xf32>
    %19 = tpu.matmul %17, %18, %cst_14 {dimension_numbers = #tpu.dot_dimension_numbers<[1], [0], [0], [1], [0, 0, 1, 1], [], []>} : vector<16x512xbf16>, vector<512x512xbf16>, vector<16x512xf32> -> vector<16x512xf32>
    %c0_15 = arith.constant 0 : index
    %c0_16 = arith.constant 0 : index
    %20 = vector.load %arg8[%c0_15, %c0_16] : memref<1x512xf32, #tpu.memory_space<vmem>>, vector<1x512xf32>
    %21 = vector.broadcast %20 : vector<1x512xf32> to vector<16x512xf32>
    %22 = arith.addf %19, %21 : vector<16x512xf32>
    %23 = math.tanh %22 : vector<16x512xf32>
    %24 = vector.extract_strided_slice %23 {offsets = [0, 0], sizes = [16, 256], strides = [1, 1]} : vector<16x512xf32> to vector<16x256xf32>
    %25 = vector.extract_strided_slice %23 {offsets = [0, 256], sizes = [16, 256], strides = [1, 1]} : vector<16x512xf32> to vector<16x256xf32>
    %c0_17 = arith.constant 0 : index
    %c0_18 = arith.constant 0 : index
    %26 = vector.load %arg2[%c0_17, %c0_18] : memref<16x256xf32, #tpu.memory_space<vmem>>, vector<16x256xf32>
    %cst_19 = arith.constant 5.000000e-01 : f32
    %27 = vector.broadcast %cst_19 : f32 to vector<16x256xf32>
    %28 = arith.mulf %27, %25 : vector<16x256xf32>
    %29 = math.exp %28 : vector<16x256xf32>
    %30 = arith.mulf %26, %29 : vector<16x256xf32>
    %31 = arith.addf %24, %30 : vector<16x256xf32>
    %c0_20 = arith.constant 0 : index
    %c0_21 = arith.constant 0 : index
    %32 = vector.load %arg9[%c0_20, %c0_21] : memref<16x256xf32, #tpu.memory_space<vmem>>, vector<16x256xf32>
    tpu.vector_store %arg9[%c0_20, %c0_21], %31 {strides = array<i32>} : memref<16x256xf32, #tpu.memory_space<vmem>>, vector<16x256xf32>,
    %c0_22 = arith.constant 0 : index
    %c0_23 = arith.constant 0 : index
    %33 = vector.load %arg10[%c0_22, %c0_23] : memref<16x256xf32, #tpu.memory_space<vmem>>, vector<16x256xf32>
    tpu.vector_store %arg10[%c0_22, %c0_23], %24 {strides = array<i32>} : memref<16x256xf32, #tpu.memory_space<vmem>>, vector<16x256xf32>,
    %c0_24 = arith.constant 0 : index
    %c0_25 = arith.constant 0 : index
    %34 = vector.load %arg11[%c0_24, %c0_25] : memref<16x256xf32, #tpu.memory_space<vmem>>, vector<16x256xf32>
    tpu.vector_store %arg11[%c0_24, %c0_25], %25 {strides = array<i32>} : memref<16x256xf32, #tpu.memory_space<vmem>>, vector<16x256xf32>,
    return
  }
  func.func @transform_0(%arg0: i32) -> (i32, i32) {
    %c0_i32 = arith.constant 0 : i32
    %c0_i32_0 = arith.constant 0 : i32
    return %arg0, %c0_i32 : i32, i32
  }
  func.func @transform_1(%arg0: i32) -> (i32, i32) {
    %c0_i32 = arith.constant 0 : i32
    %c0_i32_0 = arith.constant 0 : i32
    return %arg0, %c0_i32 : i32, i32
  }
  func.func @transform_2(%arg0: i32) -> (i32, i32) {
    %c0_i32 = arith.constant 0 : i32
    %c0_i32_0 = arith.constant 0 : i32
    %c0_i32_1 = arith.constant 0 : i32
    return %c0_i32, %c0_i32_0 : i32, i32
  }
  func.func @transform_3(%arg0: i32) -> (i32, i32) {
    %c0_i32 = arith.constant 0 : i32
    %c0_i32_0 = arith.constant 0 : i32
    %c0_i32_1 = arith.constant 0 : i32
    return %c0_i32, %c0_i32_0 : i32, i32
  }
  func.func @transform_4(%arg0: i32) -> (i32, i32) {
    %c0_i32 = arith.constant 0 : i32
    %c0_i32_0 = arith.constant 0 : i32
    %c0_i32_1 = arith.constant 0 : i32
    return %c0_i32, %c0_i32_0 : i32, i32
  }
  func.func @transform_5(%arg0: i32) -> (i32, i32) {
    %c0_i32 = arith.constant 0 : i32
    %c0_i32_0 = arith.constant 0 : i32
    %c0_i32_1 = arith.constant 0 : i32
    return %c0_i32, %c0_i32_0 : i32, i32
  }
  func.func @transform_6(%arg0: i32) -> (i32, i32) {
    %c0_i32 = arith.constant 0 : i32
    %c0_i32_0 = arith.constant 0 : i32
    %c0_i32_1 = arith.constant 0 : i32
    return %c0_i32, %c0_i32_0 : i32, i32
  }
  func.func @transform_7(%arg0: i32) -> (i32, i32) {
    %c0_i32 = arith.constant 0 : i32
    %c0_i32_0 = arith.constant 0 : i32
    %c0_i32_1 = arith.constant 0 : i32
    return %c0_i32, %c0_i32_0 : i32, i32
  }
  func.func @transform_8(%arg0: i32) -> (i32, i32) {
    %c0_i32 = arith.constant 0 : i32
    %c0_i32_0 = arith.constant 0 : i32
    return %arg0, %c0_i32 : i32, i32
  }
  func.func @transform_9(%arg0: i32) -> (i32, i32) {
    %c0_i32 = arith.constant 0 : i32
    %c0_i32_0 = arith.constant 0 : i32
    return %arg0, %c0_i32 : i32, i32
  }
  func.func @transform_10(%arg0: i32) -> (i32, i32) {
    %c0_i32 = arith.constant 0 : i32
    %c0_i32_0 = arith.constant 0 : i32
    return %arg0, %c0_i32 : i32, i32
  }
}

</mosaic_0001>

<llo_original>
// kernel: prior_network_forward.1
$region0: #{prior_network_forward.1}
  #allocation0 [shape = 'u32[]', space=smem, size = 0x4, offset = 0x4, fixed_abs, tag = 'smem constant byte address 0x4 - core index']
  #allocation1 [shape = 'u32[144,128]{1,0:T(1,128)}', space=vmem, size = 0x12000, scoped, tag = 'internal scratch']
  %s0 = inlined_call_operand.vmem [shape: f32[16,256], index: 0, kind: input, shape index: {}]
  %s1 = inlined_call_operand.vmem [shape: f32[16,256], index: 1, kind: input, shape index: {}]
  %s2 = inlined_call_operand.vmem [shape: bf16[256,256], index: 2, kind: input, shape index: {}]
  %s3 = inlined_call_operand.vmem [shape: f32[1,256], index: 3, kind: input, shape index: {}]
  %s4 = inlined_call_operand.vmem [shape: bf16[256,512], index: 4, kind: input, shape index: {}]
  %s5 = inlined_call_operand.vmem [shape: f32[1,512], index: 5, kind: input, shape index: {}]
  %s6 = inlined_call_operand.vmem [shape: bf16[512,512], index: 6, kind: input, shape index: {}]
  %s7 = inlined_call_operand.vmem [shape: f32[1,512], index: 7, kind: input, shape index: {}]
  %s8 = inlined_call_operand.hbm [shape: f32[16,256], index: 8, kind: output, shape index: {0}]
  %s9 = inlined_call_operand.hbm [shape: f32[16,256], index: 9, kind: output, shape index: {1}]
  %s10 = inlined_call_operand.hbm [shape: f32[16,256], index: 10, kind: output, shape index: {2}]
  %11 = xla_tuple %s8, %s9, %s10
  %s12 = sld [smem:[#allocation0]]
  $region58: #{prior_network_forward.1} parent=0
    _
  %s14 = ssub.s32 1, %s12
  %s15 = scalar_select 0, %s14, %s12
  $region1: #{prior_network_forward.1} parent=0
    #allocation2 [shape = 'u8[16384]{0}', space=vmem, size = 0x4000, scoped, tag = 'output window, operand 0, single buffered']
    #allocation3 [shape = 's32[1]{0}', space=sflag, size = 0x4, scoped, tag = 'scoped memory for prior_network_forward.1']
    #allocation4 [shape = 'u8[16384]{0}', space=vmem, size = 0x4000, scoped, tag = 'output window, operand 1, single buffered']
    #allocation5 [shape = 's32[1]{0}', space=sflag, size = 0x4, scoped, tag = 'scoped memory for prior_network_forward.1']
    #allocation6 [shape = 'u8[16384]{0}', space=vmem, size = 0x4000, scoped, tag = 'output window, operand 2, single buffered']
    %16 = vsyncpa [#allocation3], 0
    %17 = vsyncpa [#allocation5], 0
    // Predicated region
    $region2: #{prior_network_forward.1} parent=1 // pred_check
      _
    $region3: #{prior_network_forward.1} parent=1 // pred_check_branch
      %19 = sbr.rel (0) target = $region5
    $region4: #{prior_network_forward.1} parent=1 // pred_region
      _
    $region5: #{prior_network_forward.1} parent=1 // pred_fallthru
      _
    // Predicated region
    $region6: #{prior_network_forward.1} parent=1 // pred_check
      _
    $region7: #{prior_network_forward.1} parent=1 // pred_check_branch
      %21 = sbr.rel (0) target = $region9
    $region8: #{prior_network_forward.1} parent=1 // pred_region
      _
    $region9: #{prior_network_forward.1} parent=1 // pred_fallthru
      _
    // Predicated region
    $region10: #{prior_network_forward.1} parent=1 // pred_check
      _
    $region11: #{prior_network_forward.1} parent=1 // pred_check_branch
      %23 = sbr.rel (0) target = $region13
    $region12: #{prior_network_forward.1} parent=1 // pred_region
      _
    $region13: #{prior_network_forward.1} parent=1 // pred_fallthru
      _
    // Predicated region
    $region14: #{prior_network_forward.1} parent=1 // pred_check
      _
    $region15: #{prior_network_forward.1} parent=1 // pred_check_branch
      %25 = sbr.rel (0) target = $region17
    $region16: #{prior_network_forward.1} parent=1 // pred_region
      _
    $region17: #{prior_network_forward.1} parent=1 // pred_fallthru
      _
    // Predicated region
    $region18: #{prior_network_forward.1} parent=1 // pred_check
      _
    $region19: #{prior_network_forward.1} parent=1 // pred_check_branch
      %27 = sbr.rel (0) target = $region21
    $region20: #{prior_network_forward.1} parent=1 // pred_region
      _
    $region21: #{prior_network_forward.1} parent=1 // pred_fallthru
      _
    // Predicated region
    $region22: #{prior_network_forward.1} parent=1 // pred_check
      _
    $region23: #{prior_network_forward.1} parent=1 // pred_check_branch
      %29 = sbr.rel (0) target = $region25
    $region24: #{prior_network_forward.1} parent=1 // pred_region
      _
    $region25: #{prior_network_forward.1} parent=1 // pred_fallthru
      _
    // Predicated region
    $region26: #{prior_network_forward.1} parent=1 // pred_check
      _
    $region27: #{prior_network_forward.1} parent=1 // pred_check_branch
      %31 = sbr.rel (0) target = $region29
    $region28: #{prior_network_forward.1} parent=1 // pred_region
      _
    $region29: #{prior_network_forward.1} parent=1 // pred_fallthru
      _
    // Predicated region
    $region30: #{prior_network_forward.1} parent=1 // pred_check
      _
    $region31: #{prior_network_forward.1} parent=1 // pred_check_branch
      %33 = sbr.rel (0) target = $region33
    $region32: #{prior_network_forward.1} parent=1 // pred_region
      _
    $region33: #{prior_network_forward.1} parent=1 // pred_fallthru
      _
    %v34 = vld [vmem:[%s0] sm:$0xff]
    %v35 = vld [vmem:[%s0 + $0x8] sm:$0xff]
    %v36 = vld [vmem:[%s0 + $0x10] sm:$0xff]
    %v37 = vld [vmem:[%s0 + $0x18] sm:$0xff]
    %v38 = vpack.c.bf16 %v36, %v34
    %v39 = vpack.c.bf16 %v37, %v35
    %v40 = vld [vmem:[%s2] sm:$0xff]
    %v41 = vld [vmem:[%s2 + $0x8] sm:$0xff]
    %v42 = vld [vmem:[%s2 + $0x10] sm:$0xff]
    %v43 = vld [vmem:[%s2 + $0x18] sm:$0xff]
    %v44 = vld [vmem:[%s2 + $0x20] sm:$0xff]
    %v45 = vld [vmem:[%s2 + $0x28] sm:$0xff]
    %v46 = vld [vmem:[%s2 + $0x30] sm:$0xff]
    %v47 = vld [vmem:[%s2 + $0x38] sm:$0xff]
    %v48 = vld [vmem:[%s2 + $0x40] sm:$0xff]
    %v49 = vld [vmem:[%s2 + $0x48] sm:$0xff]
    %v50 = vld [vmem:[%s2 + $0x50] sm:$0xff]
    %v51 = vld [vmem:[%s2 + $0x58] sm:$0xff]
    %v52 = vld [vmem:[%s2 + $0x60] sm:$0xff]
    %v53 = vld [vmem:[%s2 + $0x68] sm:$0xff]
    %v54 = vld [vmem:[%s2 + $0x70] sm:$0xff]
    %v55 = vld [vmem:[%s2 + $0x78] sm:$0xff]
    %v56 = vld [vmem:[%s2 + $0x80] sm:$0xff]
    %v57 = vld [vmem:[%s2 + $0x88] sm:$0xff]
    %v58 = vld [vmem:[%s2 + $0x90] sm:$0xff]
    %v59 = vld [vmem:[%s2 + $0x98] sm:$0xff]
    %v60 = vld [vmem:[%s2 + $0xa0] sm:$0xff]
    %v61 = vld [vmem:[%s2 + $0xa8] sm:$0xff]
    %v62 = vld [vmem:[%s2 + $0xb0] sm:$0xff]
    %v63 = vld [vmem:[%s2 + $0xb8] sm:$0xff]
    %v64 = vld [vmem:[%s2 + $0xc0] sm:$0xff]
    %v65 = vld [vmem:[%s2 + $0xc8] sm:$0xff]
    %v66 = vld [vmem:[%s2 + $0xd0] sm:$0xff]
    %v67 = vld [vmem:[%s2 + $0xd8] sm:$0xff]
    %v68 = vld [vmem:[%s2 + $0xe0] sm:$0xff]
    %v69 = vld [vmem:[%s2 + $0xe8] sm:$0xff]
    %v70 = vld [vmem:[%s2 + $0xf0] sm:$0xff]
    %v71 = vld [vmem:[%s2 + $0xf8] sm:$0xff]
    %v72 = vld [vmem:[%s3] sm:$0x3]
    %v74 = vlaneseq
    %v75 = vshrl.u32 %v74, 7
    %v76 = vsub.s32 0, %v75
    %v77 = vrot.slane %v72, %v76
    %v78 = vlaneseq
    %v79 = vshrl.u32 %v78, 7
    %v80 = vsub.s32 1, %v79
    %v81 = vrot.slane %v72, %v80
    %v116 = vunpack.c.l.b16 %v40
    %v117 = vunpack.c.h.b16 %v40
    %v118 = vunpack.c.l.b16 %v41
    %v119 = vunpack.c.h.b16 %v41
    %v120 = vunpack.c.l.b16 %v42
    %v121 = vunpack.c.h.b16 %v42
    %v122 = vunpack.c.l.b16 %v43
    %v123 = vunpack.c.h.b16 %v43
    %v124 = vunpack.c.l.b16 %v44
    %v125 = vunpack.c.h.b16 %v44
    %v126 = vunpack.c.l.b16 %v45
    %v127 = vunpack.c.h.b16 %v45
    %v128 = vunpack.c.l.b16 %v46
    %v129 = vunpack.c.h.b16 %v46
    %v130 = vunpack.c.l.b16 %v47
    %v131 = vunpack.c.h.b16 %v47
    %v132 = vunpack.c.l.b16 %v48
    %v133 = vunpack.c.h.b16 %v48
    %v134 = vunpack.c.l.b16 %v49
    %v135 = vunpack.c.h.b16 %v49
    %v136 = vunpack.c.l.b16 %v50
    %v137 = vunpack.c.h.b16 %v50
    %v138 = vunpack.c.l.b16 %v51
    %v139 = vunpack.c.h.b16 %v51
    %v140 = vunpack.c.l.b16 %v52
    %v141 = vunpack.c.h.b16 %v52
    %v142 = vunpack.c.l.b16 %v53
    %v143 = vunpack.c.h.b16 %v53
    %v144 = vunpack.c.l.b16 %v54
    %v145 = vunpack.c.h.b16 %v54
    %v146 = vunpack.c.l.b16 %v55
    %v147 = vunpack.c.h.b16 %v55
    %v148 = vunpack.c.l.b16 %v56
    %v149 = vunpack.c.h.b16 %v56
    %v150 = vunpack.c.l.b16 %v57
    %v151 = vunpack.c.h.b16 %v57
    %v152 = vunpack.c.l.b16 %v58
    %v153 = vunpack.c.h.b16 %v58
    %v154 = vunpack.c.l.b16 %v59
    %v155 = vunpack.c.h.b16 %v59
    %v156 = vunpack.c.l.b16 %v60
    %v157 = vunpack.c.h.b16 %v60
    %v158 = vunpack.c.l.b16 %v61
    %v159 = vunpack.c.h.b16 %v61
    %v160 = vunpack.c.l.b16 %v62
    %v161 = vunpack.c.h.b16 %v62
    %v162 = vunpack.c.l.b16 %v63
    %v163 = vunpack.c.h.b16 %v63
    %v164 = vunpack.c.l.b16 %v64
    %v165 = vunpack.c.h.b16 %v64
    %v166 = vunpack.c.l.b16 %v65
    %v167 = vunpack.c.h.b16 %v65
    %v168 = vunpack.c.l.b16 %v66
    %v169 = vunpack.c.h.b16 %v66
    %v170 = vunpack.c.l.b16 %v67
    %v171 = vunpack.c.h.b16 %v67
    %v172 = vunpack.c.l.b16 %v68
    %v173 = vunpack.c.h.b16 %v68
    %v174 = vunpack.c.l.b16 %v69
    %v175 = vunpack.c.h.b16 %v69
    %v176 = vunpack.c.l.b16 %v70
    %v177 = vunpack.c.h.b16 %v70
    %v178 = vunpack.c.l.b16 %v71
    %v179 = vunpack.c.h.b16 %v71
    %v180 = vpack.c.b16 %v118, %v116
    %v181 = vpack.c.b16 %v119, %v117
    %v182 = vpack.c.b16 %v122, %v120
    %v183 = vpack.c.b16 %v123, %v121
    %v184 = vpack.c.b16 %v126, %v124
    %v185 = vpack.c.b16 %v127, %v125
    %v186 = vpack.c.b16 %v130, %v128
    %v187 = vpack.c.b16 %v131, %v129
    %v188 = vpack.c.b16 %v134, %v132
    %v189 = vpack.c.b16 %v135, %v133
    %v190 = vpack.c.b16 %v138, %v136
    %v191 = vpack.c.b16 %v139, %v137
    %v192 = vpack.c.b16 %v142, %v140
    %v193 = vpack.c.b16 %v143, %v141
    %v194 = vpack.c.b16 %v146, %v144
    %v195 = vpack.c.b16 %v147, %v145
    %v196 = vpack.c.b16 %v150, %v148
    %v197 = vpack.c.b16 %v151, %v149
    %v198 = vpack.c.b16 %v154, %v152
    %v199 = vpack.c.b16 %v155, %v153
    %v200 = vpack.c.b16 %v158, %v156
    %v201 = vpack.c.b16 %v159, %v157
    %v202 = vpack.c.b16 %v162, %v160
    %v203 = vpack.c.b16 %v163, %v161
    %v204 = vpack.c.b16 %v166, %v164
    %v205 = vpack.c.b16 %v167, %v165
    %v206 = vpack.c.b16 %v170, %v168
    %v207 = vpack.c.b16 %v171, %v169
    %v208 = vpack.c.b16 %v174, %v172
    %v209 = vpack.c.b16 %v175, %v173
    %v210 = vpack.c.b16 %v178, %v176
    %v211 = vpack.c.b16 %v179, %v177
    %244 = vmatprep.subr.bf16.mxu0 %v181
    %245 = vmatpush1.bf16.msra.mxu0 %v180
    %246 = vmatprep.subr.bf16.mxu0 %v183
    %247 = vmatpush1.bf16.msra.mxu0 %v182
    %248 = vmatprep.subr.bf16.mxu0 %v185
    %249 = vmatpush1.bf16.msra.mxu0 %v184
    %250 = vmatprep.subr.bf16.mxu0 %v187
    %251 = vmatpush1.bf16.msra.mxu0 %v186
    %252 = vmatprep.subr.bf16.mxu0 %v189
    %253 = vmatpush1.bf16.msra.mxu0 %v188
    %254 = vmatprep.subr.bf16.mxu0 %v191
    %255 = vmatpush1.bf16.msra.mxu0 %v190
    %256 = vmatprep.subr.bf16.mxu0 %v193
    %257 = vmatpush1.bf16.msra.mxu0 %v192
    %258 = vmatprep.subr.bf16.mxu0 %v195
    %259 = vmatpush1.bf16.msra.mxu0 %v194
    %260 = vmatprep.subr.bf16.mxu0 %v197
    %261 = vmatpush1.bf16.msra.mxu0 %v196
    %262 = vmatprep.subr.bf16.mxu0 %v199
    %263 = vmatpush1.bf16.msra.mxu0 %v198
    %264 = vmatprep.subr.bf16.mxu0 %v201
    %265 = vmatpush1.bf16.msra.mxu0 %v200
    %266 = vmatprep.subr.bf16.mxu0 %v203
    %267 = vmatpush1.bf16.msra.mxu0 %v202
    %268 = vmatprep.subr.bf16.mxu0 %v205
    %269 = vmatpush1.bf16.msra.mxu0 %v204
    %270 = vmatprep.subr.bf16.mxu0 %v207
    %271 = vmatpush1.bf16.msra.mxu0 %v206
    %272 = vmatprep.subr.bf16.mxu0 %v209
    %273 = vmatpush1.bf16.msra.mxu0 %v208
    %274 = vmatprep.subr.bf16.mxu0 %v211
    %275 = vmatpush1.bf16.msra.mxu0 %v210
    %276 = vmatprep.mubr.bf16.mxu0 %v39
    %277 = vmatmul.mubr.bf16.gmra.mrb[0].mxu0 %v38
    %v278 = vpop.f32.mrb[0].mxu0
    %v279 = vadd.f32 %v77, %v278
    %v280 = vpop.f32.mrb[0].mxu0
    %v281 = vadd.f32 %v81, %v280
    %v282 = vpop.f32.mrb[0].mxu0
    %v283 = vadd.f32 %v77, %v282
    %v284 = vpop.f32.mrb[0].mxu0
    %v285 = vadd.f32 %v81, %v284
    %286 = vdwg.mxu0
    %v287 = vmax.f32 %v279, 0.0
    %v288 = vmax.f32 %v281, 0.0
    %v289 = vmax.f32 %v283, 0.0
    %v290 = vmax.f32 %v285, 0.0
    %v291 = vpack.c.bf16 %v289, %v287
    %v292 = vpack.c.bf16 %v290, %v288
    %v293 = vld [vmem:[%s4] sm:$0xff]
    %v294 = vld [vmem:[%s4 + $0x8] sm:$0xff]
    %v295 = vld [vmem:[%s4 + $0x10] sm:$0xff]
    %v296 = vld [vmem:[%s4 + $0x18] sm:$0xff]
    %v297 = vld [vmem:[%s4 + $0x20] sm:$0xff]
    %v298 = vld [vmem:[%s4 + $0x28] sm:$0xff]
    %v299 = vld [vmem:[%s4 + $0x30] sm:$0xff]
    %v300 = vld [vmem:[%s4 + $0x38] sm:$0xff]
    %v301 = vld [vmem:[%s4 + $0x40] sm:$0xff]
    %v302 = vld [vmem:[%s4 + $0x48] sm:$0xff]
    %v303 = vld [vmem:[%s4 + $0x50] sm:$0xff]
    %v304 = vld [vmem:[%s4 + $0x58] sm:$0xff]
    %v305 = vld [vmem:[%s4 + $0x60] sm:$0xff]
    %v306 = vld [vmem:[%s4 + $0x68] sm:$0xff]
    %v307 = vld [vmem:[%s4 + $0x70] sm:$0xff]
    %v308 = vld [vmem:[%s4 + $0x78] sm:$0xff]
    %v309 = vld [vmem:[%s4 + $0x80] sm:$0xff]
    %v310 = vld [vmem:[%s4 + $0x88] sm:$0xff]
    %v311 = vld [vmem:[%s4 + $0x90] sm:$0xff]
    %v312 = vld [vmem:[%s4 + $0x98] sm:$0xff]
    %v313 = vld [vmem:[%s4 + $0xa0] sm:$0xff]
    %v314 = vld [vmem:[%s4 + $0xa8] sm:$0xff]
    %v315 = vld [vmem:[%s4 + $0xb0] sm:$0xff]
    %v316 = vld [vmem:[%s4 + $0xb8] sm:$0xff]
    %v317 = vld [vmem:[%s4 + $0xc0] sm:$0xff]
    %v318 = vld [vmem:[%s4 + $0xc8] sm:$0xff]
    %v319 = vld [vmem:[%s4 + $0xd0] sm:$0xff]
    %v320 = vld [vmem:[%s4 + $0xd8] sm:$0xff]
    %v321 = vld [vmem:[%s4 + $0xe0] sm:$0xff]
    %v322 = vld [vmem:[%s4 + $0xe8] sm:$0xff]
    %v323 = vld [vmem:[%s4 + $0xf0] sm:$0xff]
    %v324 = vld [vmem:[%s4 + $0xf8] sm:$0xff]
    %v325 = vld [vmem:[%s4 + $0x100] sm:$0xff]
    %v326 = vld [vmem:[%s4 + $0x108] sm:$0xff]
    %v327 = vld [vmem:[%s4 + $0x110] sm:$0xff]
    %v328 = vld [vmem:[%s4 + $0x118] sm:$0xff]
    %v329 = vld [vmem:[%s4 + $0x120] sm:$0xff]
    %v330 = vld [vmem:[%s4 + $0x128] sm:$0xff]
    %v331 = vld [vmem:[%s4 + $0x130] sm:$0xff]
    %v332 = vld [vmem:[%s4 + $0x138] sm:$0xff]
    %v333 = vld [vmem:[%s4 + $0x140] sm:$0xff]
    %v334 = vld [vmem:[%s4 + $0x148] sm:$0xff]
    %v335 = vld [vmem:[%s4 + $0x150] sm:$0xff]
    %v336 = vld [vmem:[%s4 + $0x158] sm:$0xff]
    %v337 = vld [vmem:[%s4 + $0x160] sm:$0xff]
    %v338 = vld [vmem:[%s4 + $0x168] sm:$0xff]
    %v339 = vld [vmem:[%s4 + $0x170] sm:$0xff]
    %v340 = vld [vmem:[%s4 + $0x178] sm:$0xff]
    %v341 = vld [vmem:[%s4 + $0x180] sm:$0xff]
    %v342 = vld [vmem:[%s4 + $0x188] sm:$0xff]
    %v343 = vld [vmem:[%s4 + $0x190] sm:$0xff]
    %v344 = vld [vmem:[%s4 + $0x198] sm:$0xff]
    %v345 = vld [vmem:[%s4 + $0x1a0] sm:$0xff]
    %v346 = vld [vmem:[%s4 + $0x1a8] sm:$0xff]
    %v347 = vld [vmem:[%s4 + $0x1b0] sm:$0xff]
    %v348 = vld [vmem:[%s4 + $0x1b8] sm:$0xff]
    %v349 = vld [vmem:[%s4 + $0x1c0] sm:$0xff]
    %v350 = vld [vmem:[%s4 + $0x1c8] sm:$0xff]
    %v351 = vld [vmem:[%s4 + $0x1d0] sm:$0xff]
    %v352 = vld [vmem:[%s4 + $0x1d8] sm:$0xff]
    %v353 = vld [vmem:[%s4 + $0x1e0] sm:$0xff]
    %v354 = vld [vmem:[%s4 + $0x1e8] sm:$0xff]
    %v355 = vld [vmem:[%s4 + $0x1f0] sm:$0xff]
    %v356 = vld [vmem:[%s4 + $0x1f8] sm:$0xff]
    %v357 = vld [vmem:[%s5] sm:$0xf]
    %v359 = vlaneseq
    %v360 = vshrl.u32 %v359, 7
    %v361 = vsub.s32 0, %v360
    %v362 = vrot.slane %v357, %v361
    %v363 = vlaneseq
    %v364 = vshrl.u32 %v363, 7
    %v365 = vsub.s32 1, %v364
    %v366 = vrot.slane %v357, %v365
    %v367 = vlaneseq
    %v368 = vshrl.u32 %v367, 7
    %v369 = vsub.s32 2, %v368
    %v370 = vrot.slane %v357, %v369
    %v371 = vlaneseq
    %v372 = vshrl.u32 %v371, 7
    %v373 = vsub.s32 3, %v372
    %v374 = vrot.slane %v357, %v373
    %v443 = vunpack.c.l.b16 %v293
    %v444 = vunpack.c.h.b16 %v293
    %v445 = vunpack.c.l.b16 %v294
    %v446 = vunpack.c.h.b16 %v294
    %v447 = vunpack.c.l.b16 %v295
    %v448 = vunpack.c.h.b16 %v295
    %v449 = vunpack.c.l.b16 %v296
    %v450 = vunpack.c.h.b16 %v296
    %v451 = vunpack.c.l.b16 %v297
    %v452 = vunpack.c.h.b16 %v297
    %v453 = vunpack.c.l.b16 %v298
    %v454 = vunpack.c.h.b16 %v298
    %v455 = vunpack.c.l.b16 %v299
    %v456 = vunpack.c.h.b16 %v299
    %v457 = vunpack.c.l.b16 %v300
    %v458 = vunpack.c.h.b16 %v300
    %v459 = vunpack.c.l.b16 %v301
    %v460 = vunpack.c.h.b16 %v301
    %v461 = vunpack.c.l.b16 %v302
    %v462 = vunpack.c.h.b16 %v302
    %v463 = vunpack.c.l.b16 %v303
    %v464 = vunpack.c.h.b16 %v303
    %v465 = vunpack.c.l.b16 %v304
    %v466 = vunpack.c.h.b16 %v304
    %v467 = vunpack.c.l.b16 %v305
    %v468 = vunpack.c.h.b16 %v305
    %v469 = vunpack.c.l.b16 %v306
    %v470 = vunpack.c.h.b16 %v306
    %v471 = vunpack.c.l.b16 %v307
    %v472 = vunpack.c.h.b16 %v307
    %v473 = vunpack.c.l.b16 %v308
    %v474 = vunpack.c.h.b16 %v308
    %v475 = vunpack.c.l.b16 %v309
    %v476 = vunpack.c.h.b16 %v309
    %v477 = vunpack.c.l.b16 %v310
    %v478 = vunpack.c.h.b16 %v310
    %v479 = vunpack.c.l.b16 %v311
    %v480 = vunpack.c.h.b16 %v311
    %v481 = vunpack.c.l.b16 %v312
    %v482 = vunpack.c.h.b16 %v312
    %v483 = vunpack.c.l.b16 %v313
    %v484 = vunpack.c.h.b16 %v313
    %v485 = vunpack.c.l.b16 %v314
    %v486 = vunpack.c.h.b16 %v314
    %v487 = vunpack.c.l.b16 %v315
    %v488 = vunpack.c.h.b16 %v315
    %v489 = vunpack.c.l.b16 %v316
    %v490 = vunpack.c.h.b16 %v316
    %v491 = vunpack.c.l.b16 %v317
    %v492 = vunpack.c.h.b16 %v317
    %v493 = vunpack.c.l.b16 %v318
    %v494 = vunpack.c.h.b16 %v318
    %v495 = vunpack.c.l.b16 %v319
    %v496 = vunpack.c.h.b16 %v319
    %v497 = vunpack.c.l.b16 %v320
    %v498 = vunpack.c.h.b16 %v320
    %v499 = vunpack.c.l.b16 %v321
    %v500 = vunpack.c.h.b16 %v321
    %v501 = vunpack.c.l.b16 %v322
    %v502 = vunpack.c.h.b16 %v322
    %v503 = vunpack.c.l.b16 %v323
    %v504 = vunpack.c.h.b16 %v323
    %v505 = vunpack.c.l.b16 %v324
    %v506 = vunpack.c.h.b16 %v324
    %v507 = vunpack.c.l.b16 %v325
    %v508 = vunpack.c.h.b16 %v325
    %v509 = vunpack.c.l.b16 %v326
    %v510 = vunpack.c.h.b16 %v326
    %v511 = vunpack.c.l.b16 %v327
    %v512 = vunpack.c.h.b16 %v327
    %v513 = vunpack.c.l.b16 %v328
    %v514 = vunpack.c.h.b16 %v328
    %v515 = vunpack.c.l.b16 %v329
    %v516 = vunpack.c.h.b16 %v329
    %v517 = vunpack.c.l.b16 %v330
    %v518 = vunpack.c.h.b16 %v330
    %v519 = vunpack.c.l.b16 %v331
    %v520 = vunpack.c.h.b16 %v331
    %v521 = vunpack.c.l.b16 %v332
    %v522 = vunpack.c.h.b16 %v332
    %v523 = vunpack.c.l.b16 %v333
    %v524 = vunpack.c.h.b16 %v333
    %v525 = vunpack.c.l.b16 %v334
    %v526 = vunpack.c.h.b16 %v334
    %v527 = vunpack.c.l.b16 %v335
    %v528 = vunpack.c.h.b16 %v335
    %v529 = vunpack.c.l.b16 %v336
    %v530 = vunpack.c.h.b16 %v336
    %v531 = vunpack.c.l.b16 %v337
    %v532 = vunpack.c.h.b16 %v337
    %v533 = vunpack.c.l.b16 %v338
    %v534 = vunpack.c.h.b16 %v338
    %v535 = vunpack.c.l.b16 %v339
    %v536 = vunpack.c.h.b16 %v339
    %v537 = vunpack.c.l.b16 %v340
    %v538 = vunpack.c.h.b16 %v340
    %v539 = vunpack.c.l.b16 %v341
    %v540 = vunpack.c.h.b16 %v341
    %v541 = vunpack.c.l.b16 %v342
    %v542 = vunpack.c.h.b16 %v342
    %v543 = vunpack.c.l.b16 %v343
    %v544 = vunpack.c.h.b16 %v343
    %v545 = vunpack.c.l.b16 %v344
    %v546 = vunpack.c.h.b16 %v344
    %v547 = vunpack.c.l.b16 %v345
    %v548 = vunpack.c.h.b16 %v345
    %v549 = vunpack.c.l.b16 %v346
    %v550 = vunpack.c.h.b16 %v346
    %v551 = vunpack.c.l.b16 %v347
    %v552 = vunpack.c.h.b16 %v347
    %v553 = vunpack.c.l.b16 %v348
    %v554 = vunpack.c.h.b16 %v348
    %v555 = vunpack.c.l.b16 %v349
    %v556 = vunpack.c.h.b16 %v349
    %v557 = vunpack.c.l.b16 %v350
    %v558 = vunpack.c.h.b16 %v350
    %v559 = vunpack.c.l.b16 %v351
    %v560 = vunpack.c.h.b16 %v351
    %v561 = vunpack.c.l.b16 %v352
    %v562 = vunpack.c.h.b16 %v352
    %v563 = vunpack.c.l.b16 %v353
    %v564 = vunpack.c.h.b16 %v353
    %v565 = vunpack.c.l.b16 %v354
    %v566 = vunpack.c.h.b16 %v354
    %v567 = vunpack.c.l.b16 %v355
    %v568 = vunpack.c.h.b16 %v355
    %v569 = vunpack.c.l.b16 %v356
    %v570 = vunpack.c.h.b16 %v356
    %v571 = vpack.c.b16 %v447, %v443
    %v572 = vpack.c.b16 %v448, %v444
    %v573 = vpack.c.b16 %v449, %v445
    %v574 = vpack.c.b16 %v450, %v446
    %v575 = vpack.c.b16 %v455, %v451
    %v576 = vpack.c.b16 %v456, %v452
    %v577 = vpack.c.b16 %v457, %v453
    %v578 = vpack.c.b16 %v458, %v454
    %v579 = vpack.c.b16 %v463, %v459
    %v580 = vpack.c.b16 %v464, %v460
    %v581 = vpack.c.b16 %v465, %v461
    %v582 = vpack.c.b16 %v466, %v462
    %v583 = vpack.c.b16 %v471, %v467
    %v584 = vpack.c.b16 %v472, %v468
    %v585 = vpack.c.b16 %v473, %v469
    %v586 = vpack.c.b16 %v474, %v470
    %v587 = vpack.c.b16 %v479, %v475
    %v588 = vpack.c.b16 %v480, %v476
    %v589 = vpack.c.b16 %v481, %v477
    %v590 = vpack.c.b16 %v482, %v478
    %v591 = vpack.c.b16 %v487, %v483
    %v592 = vpack.c.b16 %v488, %v484
    %v593 = vpack.c.b16 %v489, %v485
    %v594 = vpack.c.b16 %v490, %v486
    %v595 = vpack.c.b16 %v495, %v491
    %v596 = vpack.c.b16 %v496, %v492
    %v597 = vpack.c.b16 %v497, %v493
    %v598 = vpack.c.b16 %v498, %v494
    %v599 = vpack.c.b16 %v503, %v499
    %v600 = vpack.c.b16 %v504, %v500
    %v601 = vpack.c.b16 %v505, %v501
    %v602 = vpack.c.b16 %v506, %v502
    %v603 = vpack.c.b16 %v511, %v507
    %v604 = vpack.c.b16 %v512, %v508
    %v605 = vpack.c.b16 %v513, %v509
    %v606 = vpack.c.b16 %v514, %v510
    %v607 = vpack.c.b16 %v519, %v515
    %v608 = vpack.c.b16 %v520, %v516
    %v609 = vpack.c.b16 %v521, %v517
    %v610 = vpack.c.b16 %v522, %v518
    %v611 = vpack.c.b16 %v527, %v523
    %v612 = vpack.c.b16 %v528, %v524
    %v613 = vpack.c.b16 %v529, %v525
    %v614 = vpack.c.b16 %v530, %v526
    %v615 = vpack.c.b16 %v535, %v531
    %v616 = vpack.c.b16 %v536, %v532
    %v617 = vpack.c.b16 %v537, %v533
    %v618 = vpack.c.b16 %v538, %v534
    %v619 = vpack.c.b16 %v543, %v539
    %v620 = vpack.c.b16 %v544, %v540
    %v621 = vpack.c.b16 %v545, %v541
    %v622 = vpack.c.b16 %v546, %v542
    %v623 = vpack.c.b16 %v551, %v547
    %v624 = vpack.c.b16 %v552, %v548
    %v625 = vpack.c.b16 %v553, %v549
    %v626 = vpack.c.b16 %v554, %v550
    %v627 = vpack.c.b16 %v559, %v555
    %v628 = vpack.c.b16 %v560, %v556
    %v629 = vpack.c.b16 %v561, %v557
    %v630 = vpack.c.b16 %v562, %v558
    %v631 = vpack.c.b16 %v567, %v563
    %v632 = vpack.c.b16 %v568, %v564
    %v633 = vpack.c.b16 %v569, %v565
    %v634 = vpack.c.b16 %v570, %v566
    %699 = vmatprep.subr.bf16.mxu0 %v572
    %700 = vmatpush1.bf16.msra.mxu0 %v571
    %701 = vmatprep.subr.bf16.mxu0 %v576
    %702 = vmatpush1.bf16.msra.mxu0 %v575
    %703 = vmatprep.subr.bf16.mxu0 %v580
    %704 = vmatpush1.bf16.msra.mxu0 %v579
    %705 = vmatprep.subr.bf16.mxu0 %v584
    %706 = vmatpush1.bf16.msra.mxu0 %v583
    %707 = vmatprep.subr.bf16.mxu0 %v588
    %708 = vmatpush1.bf16.msra.mxu0 %v587
    %709 = vmatprep.subr.bf16.mxu0 %v592
    %710 = vmatpush1.bf16.msra.mxu0 %v591
    %711 = vmatprep.subr.bf16.mxu0 %v596
    %712 = vmatpush1.bf16.msra.mxu0 %v595
    %713 = vmatprep.subr.bf16.mxu0 %v600
    %714 = vmatpush1.bf16.msra.mxu0 %v599
    %715 = vmatprep.subr.bf16.mxu0 %v604
    %716 = vmatpush1.bf16.msra.mxu0 %v603
    %717 = vmatprep.subr.bf16.mxu0 %v608
    %718 = vmatpush1.bf16.msra.mxu0 %v607
    %719 = vmatprep.subr.bf16.mxu0 %v612
    %720 = vmatpush1.bf16.msra.mxu0 %v611
    %721 = vmatprep.subr.bf16.mxu0 %v616
    %722 = vmatpush1.bf16.msra.mxu0 %v615
    %723 = vmatprep.subr.bf16.mxu0 %v620
    %724 = vmatpush1.bf16.msra.mxu0 %v619
    %725 = vmatprep.subr.bf16.mxu0 %v624
    %726 = vmatpush1.bf16.msra.mxu0 %v623
    %727 = vmatprep.subr.bf16.mxu0 %v628
    %728 = vmatpush1.bf16.msra.mxu0 %v627
    %729 = vmatprep.subr.bf16.mxu0 %v632
    %730 = vmatpush1.bf16.msra.mxu0 %v631
    %731 = vmatprep.mubr.bf16.mxu0 %v292
    %732 = vmatmul.mubr.bf16.gmra.mrb[0].mxu0 %v291
    %v733 = vpop.f32.mrb[0].mxu0
    %v734 = vadd.f32 %v362, %v733
    %v735 = vpop.f32.mrb[0].mxu0
    %v736 = vadd.f32 %v366, %v735
    %v737 = vpop.f32.mrb[0].mxu0
    %v738 = vadd.f32 %v362, %v737
    %v739 = vpop.f32.mrb[0].mxu0
    %v740 = vadd.f32 %v366, %v739
    %741 = vdwg.mxu0
    %742 = vmatprep.subr.bf16.mxu0 %v574
    %743 = vmatpush1.bf16.msra.mxu0 %v573
    %744 = vmatprep.subr.bf16.mxu0 %v578
    %745 = vmatpush1.bf16.msra.mxu0 %v577
    %746 = vmatprep.subr.bf16.mxu0 %v582
    %747 = vmatpush1.bf16.msra.mxu0 %v581
    %748 = vmatprep.subr.bf16.mxu0 %v586
    %749 = vmatpush1.bf16.msra.mxu0 %v585
    %750 = vmatprep.subr.bf16.mxu0 %v590
    %751 = vmatpush1.bf16.msra.mxu0 %v589
    %752 = vmatprep.subr.bf16.mxu0 %v594
    %753 = vmatpush1.bf16.msra.mxu0 %v593
    %754 = vmatprep.subr.bf16.mxu0 %v598
    %755 = vmatpush1.bf16.msra.mxu0 %v597
    %756 = vmatprep.subr.bf16.mxu0 %v602
    %757 = vmatpush1.bf16.msra.mxu0 %v601
    %758 = vmatprep.subr.bf16.mxu0 %v606
    %759 = vmatpush1.bf16.msra.mxu0 %v605
    %760 = vmatprep.subr.bf16.mxu0 %v610
    %761 = vmatpush1.bf16.msra.mxu0 %v609
    %762 = vmatprep.subr.bf16.mxu0 %v614
    %763 = vmatpush1.bf16.msra.mxu0 %v613
    %764 = vmatprep.subr.bf16.mxu0 %v618
    %765 = vmatpush1.bf16.msra.mxu0 %v617
    %766 = vmatprep.subr.bf16.mxu0 %v622
    %767 = vmatpush1.bf16.msra.mxu0 %v621
    %768 = vmatprep.subr.bf16.mxu0 %v626
    %769 = vmatpush1.bf16.msra.mxu0 %v625
    %770 = vmatprep.subr.bf16.mxu0 %v630
    %771 = vmatpush1.bf16.msra.mxu0 %v629
    %772 = vmatprep.subr.bf16.mxu0 %v634
    %773 = vmatpush1.bf16.msra.mxu0 %v633
    %774 = vmatprep.mubr.bf16.mxu0 %v292
    %775 = vmatmul.mubr.bf16.gmra.mrb[0].mxu0 %v291
    %v776 = vpop.f32.mrb[0].mxu0
    %v777 = vadd.f32 %v370, %v776
    %v778 = vpop.f32.mrb[0].mxu0
    %v779 = vadd.f32 %v374, %v778
    %v780 = vpop.f32.mrb[0].mxu0
    %v781 = vadd.f32 %v370, %v780
    %v782 = vpop.f32.mrb[0].mxu0
    %v783 = vadd.f32 %v374, %v782
    %784 = vdwg.mxu0
    %v785 = vmax.f32 %v734, 0.0
    %v786 = vmax.f32 %v736, 0.0
    %v787 = vmax.f32 %v777, 0.0
    %v788 = vmax.f32 %v779, 0.0
    %v789 = vmax.f32 %v738, 0.0
    %v790 = vmax.f32 %v740, 0.0
    %v791 = vmax.f32 %v781, 0.0
    %v792 = vmax.f32 %v783, 0.0
    %v793 = vpack.c.bf16 %v789, %v785
    %v794 = vpack.c.bf16 %v790, %v786
    %v795 = vpack.c.bf16 %v791, %v787
    %v796 = vpack.c.bf16 %v792, %v788
    %v797 = vld [vmem:[%s6] sm:$0xff]
    %v798 = vld [vmem:[%s6 + $0x8] sm:$0xff]
    %v799 = vld [vmem:[%s6 + $0x10] sm:$0xff]
    %v800 = vld [vmem:[%s6 + $0x18] sm:$0xff]
    %v801 = vld [vmem:[%s6 + $0x20] sm:$0xff]
    %v802 = vld [vmem:[%s6 + $0x28] sm:$0xff]
    %v803 = vld [vmem:[%s6 + $0x30] sm:$0xff]
    %v804 = vld [vmem:[%s6 + $0x38] sm:$0xff]
    %v805 = vld [vmem:[%s6 + $0x40] sm:$0xff]
    %v806 = vld [vmem:[%s6 + $0x48] sm:$0xff]
    %v807 = vld [vmem:[%s6 + $0x50] sm:$0xff]
    %v808 = vld [vmem:[%s6 + $0x58] sm:$0xff]
    %v809 = vld [vmem:[%s6 + $0x60] sm:$0xff]
    %v810 = vld [vmem:[%s6 + $0x68] sm:$0xff]
    %v811 = vld [vmem:[%s6 + $0x70] sm:$0xff]
    %v812 = vld [vmem:[%s6 + $0x78] sm:$0xff]
    %v813 = vld [vmem:[%s6 + $0x80] sm:$0xff]
    %v814 = vld [vmem:[%s6 + $0x88] sm:$0xff]
    %v815 = vld [vmem:[%s6 + $0x90] sm:$0xff]
    %v816 = vld [vmem:[%s6 + $0x98] sm:$0xff]
    %v817 = vld [vmem:[%s6 + $0xa0] sm:$0xff]
    %v818 = vld [vmem:[%s6 + $0xa8] sm:$0xff]
    %v819 = vld [vmem:[%s6 + $0xb0] sm:$0xff]
    %v820 = vld [vmem:[%s6 + $0xb8] sm:$0xff]
    %v821 = vld [vmem:[%s6 + $0xc0] sm:$0xff]
    %v822 = vld [vmem:[%s6 + $0xc8] sm:$0xff]
    %v823 = vld [vmem:[%s6 + $0xd0] sm:$0xff]
    %v824 = vld [vmem:[%s6 + $0xd8] sm:$0xff]
    %v825 = vld [vmem:[%s6 + $0xe0] sm:$0xff]
    %v826 = vld [vmem:[%s6 + $0xe8] sm:$0xff]
    %v827 = vld [vmem:[%s6 + $0xf0] sm:$0xff]
    %v828 = vld [vmem:[%s6 + $0xf8] sm:$0xff]
    %v829 = vld [vmem:[%s6 + $0x100] sm:$0xff]
    %v830 = vld [vmem:[%s6 + $0x108] sm:$0xff]
    %v831 = vld [vmem:[%s6 + $0x110] sm:$0xff]
    %v832 = vld [vmem:[%s6 + $0x118] sm:$0xff]
    %v833 = vld [vmem:[%s6 + $0x120] sm:$0xff]
    %v834 = vld [vmem:[%s6 + $0x128] sm:$0xff]
    %v835 = vld [vmem:[%s6 + $0x130] sm:$0xff]
    %v836 = vld [vmem:[%s6 + $0x138] sm:$0xff]
    %v837 = vld [vmem:[%s6 + $0x140] sm:$0xff]
    %v838 = vld [vmem:[%s6 + $0x148] sm:$0xff]
    %v839 = vld [vmem:[%s6 + $0x150] sm:$0xff]
    %v840 = vld [vmem:[%s6 + $0x158] sm:$0xff]
    %v841 = vld [vmem:[%s6 + $0x160] sm:$0xff]
    %v842 = vld [vmem:[%s6 + $0x168] sm:$0xff]
    %v843 = vld [vmem:[%s6 + $0x170] sm:$0xff]
    %v844 = vld [vmem:[%s6 + $0x178] sm:$0xff]
    %v845 = vld [vmem:[%s6 + $0x180] sm:$0xff]
    %v846 = vld [vmem:[%s6 + $0x188] sm:$0xff]
    %v847 = vld [vmem:[%s6 + $0x190] sm:$0xff]
    %v848 = vld [vmem:[%s6 + $0x198] sm:$0xff]
    %v849 = vld [vmem:[%s6 + $0x1a0] sm:$0xff]
    %v850 = vld [vmem:[%s6 + $0x1a8] sm:$0xff]
    %v851 = vld [vmem:[%s6 + $0x1b0] sm:$0xff]
    %v852 = vld [vmem:[%s6 + $0x1b8] sm:$0xff]
    %v853 = vld [vmem:[%s6 + $0x1c0] sm:$0xff]
    %v854 = vld [vmem:[%s6 + $0x1c8] sm:$0xff]
    %v855 = vld [vmem:[%s6 + $0x1d0] sm:$0xff]
    %v856 = vld [vmem:[%s6 + $0x1d8] sm:$0xff]
    %v857 = vld [vmem:[%s6 + $0x1e0] sm:$0xff]
    %v858 = vld [vmem:[%s6 + $0x1e8] sm:$0xff]
    %v859 = vld [vmem:[%s6 + $0x1f0] sm:$0xff]
    %v860 = vld [vmem:[%s6 + $0x1f8] sm:$0xff]
    %v861 = vld [vmem:[%s6 + $0x200] sm:$0xff]
    %v862 = vld [vmem:[%s6 + $0x208] sm:$0xff]
    %v863 = vld [vmem:[%s6 + $0x210] sm:$0xff]
    %v864 = vld [vmem:[%s6 + $0x218] sm:$0xff]
    %v865 = vld [vmem:[%s6 + $0x220] sm:$0xff]
    %v866 = vld [vmem:[%s6 + $0x228] sm:$0xff]
    %v867 = vld [vmem:[%s6 + $0x230] sm:$0xff]
    %v868 = vld [vmem:[%s6 + $0x238] sm:$0xff]
    %v869 = vld [vmem:[%s6 + $0x240] sm:$0xff]
    %v870 = vld [vmem:[%s6 + $0x248] sm:$0xff]
    %v871 = vld [vmem:[%s6 + $0x250] sm:$0xff]
    %v872 = vld [vmem:[%s6 + $0x258] sm:$0xff]
    %v873 = vld [vmem:[%s6 + $0x260] sm:$0xff]
    %v874 = vld [vmem:[%s6 + $0x268] sm:$0xff]
    %v875 = vld [vmem:[%s6 + $0x270] sm:$0xff]
    %v876 = vld [vmem:[%s6 + $0x278] sm:$0xff]
    %v877 = vld [vmem:[%s6 + $0x280] sm:$0xff]
    %v878 = vld [vmem:[%s6 + $0x288] sm:$0xff]
    %v879 = vld [vmem:[%s6 + $0x290] sm:$0xff]
    %v880 = vld [vmem:[%s6 + $0x298] sm:$0xff]
    %v881 = vld [vmem:[%s6 + $0x2a0] sm:$0xff]
    %v882 = vld [vmem:[%s6 + $0x2a8] sm:$0xff]
    %v883 = vld [vmem:[%s6 + $0x2b0] sm:$0xff]
    %v884 = vld [vmem:[%s6 + $0x2b8] sm:$0xff]
    %v885 = vld [vmem:[%s6 + $0x2c0] sm:$0xff]
    %v886 = vld [vmem:[%s6 + $0x2c8] sm:$0xff]
    %v887 = vld [vmem:[%s6 + $0x2d0] sm:$0xff]
    %v888 = vld [vmem:[%s6 + $0x2d8] sm:$0xff]
    %v889 = vld [vmem:[%s6 + $0x2e0] sm:$0xff]
    %v890 = vld [vmem:[%s6 + $0x2e8] sm:$0xff]
    %v891 = vld [vmem:[%s6 + $0x2f0] sm:$0xff]
    %v892 = vld [vmem:[%s6 + $0x2f8] sm:$0xff]
    %v893 = vld [vmem:[%s6 + $0x300] sm:$0xff]
    %v894 = vld [vmem:[%s6 + $0x308] sm:$0xff]
    %v895 = vld [vmem:[%s6 + $0x310] sm:$0xff]
    %v896 = vld [vmem:[%s6 + $0x318] sm:$0xff]
    %v897 = vld [vmem:[%s6 + $0x320] sm:$0xff]
    %v898 = vld [vmem:[%s6 + $0x328] sm:$0xff]
    %v899 = vld [vmem:[%s6 + $0x330] sm:$0xff]
    %v900 = vld [vmem:[%s6 + $0x338] sm:$0xff]
    %v901 = vld [vmem:[%s6 + $0x340] sm:$0xff]
    %v902 = vld [vmem:[%s6 + $0x348] sm:$0xff]
    %v903 = vld [vmem:[%s6 + $0x350] sm:$0xff]
    %v904 = vld [vmem:[%s6 + $0x358] sm:$0xff]
    %v905 = vld [vmem:[%s6 + $0x360] sm:$0xff]
    %v906 = vld [vmem:[%s6 + $0x368] sm:$0xff]
    %v907 = vld [vmem:[%s6 + $0x370] sm:$0xff]
    %v908 = vld [vmem:[%s6 + $0x378] sm:$0xff]
    %v909 = vld [vmem:[%s6 + $0x380] sm:$0xff]
    %v910 = vld [vmem:[%s6 + $0x388] sm:$0xff]
    %v911 = vld [vmem:[%s6 + $0x390] sm:$0xff]
    %v912 = vld [vmem:[%s6 + $0x398] sm:$0xff]
    %v913 = vld [vmem:[%s6 + $0x3a0] sm:$0xff]
    %v914 = vld [vmem:[%s6 + $0x3a8] sm:$0xff]
    %v915 = vld [vmem:[%s6 + $0x3b0] sm:$0xff]
    %v916 = vld [vmem:[%s6 + $0x3b8] sm:$0xff]
    %v917 = vld [vmem:[%s6 + $0x3c0] sm:$0xff]
    %v918 = vld [vmem:[%s6 + $0x3c8] sm:$0xff]
    %v919 = vld [vmem:[%s6 + $0x3d0] sm:$0xff]
    %v920 = vld [vmem:[%s6 + $0x3d8] sm:$0xff]
    %v921 = vld [vmem:[%s6 + $0x3e0] sm:$0xff]
    %v922 = vld [vmem:[%s6 + $0x3e8] sm:$0xff]
    %v923 = vld [vmem:[%s6 + $0x3f0] sm:$0xff]
    %v924 = vld [vmem:[%s6 + $0x3f8] sm:$0xff]
    %v925 = vld [vmem:[%s7] sm:$0xf]
    %v927 = vlaneseq
    %v928 = vshrl.u32 %v927, 7
    %v929 = vsub.s32 0, %v928
    %v930 = vrot.slane %v925, %v929
    %v931 = vlaneseq
    %v932 = vshrl.u32 %v931, 7
    %v933 = vsub.s32 1, %v932
    %v934 = vrot.slane %v925, %v933
    %v935 = vlaneseq
    %v936 = vshrl.u32 %v935, 7
    %v937 = vsub.s32 2, %v936
    %v938 = vrot.slane %v925, %v937
    %v939 = vlaneseq
    %v940 = vshrl.u32 %v939, 7
    %v941 = vsub.s32 3, %v940
    %v942 = vrot.slane %v925, %v941
    %v1075 = vunpack.c.l.b16 %v797
    %v1076 = vunpack.c.h.b16 %v797
    %v1077 = vunpack.c.l.b16 %v798
    %v1078 = vunpack.c.h.b16 %v798
    %v1079 = vunpack.c.l.b16 %v799
    %v1080 = vunpack.c.h.b16 %v799
    %v1081 = vunpack.c.l.b16 %v800
    %v1082 = vunpack.c.h.b16 %v800
    %v1083 = vunpack.c.l.b16 %v801
    %v1084 = vunpack.c.h.b16 %v801
    %v1085 = vunpack.c.l.b16 %v802
    %v1086 = vunpack.c.h.b16 %v802
    %v1087 = vunpack.c.l.b16 %v803
    %v1088 = vunpack.c.h.b16 %v803
    %v1089 = vunpack.c.l.b16 %v804
    %v1090 = vunpack.c.h.b16 %v804
    %v1091 = vunpack.c.l.b16 %v805
    %v1092 = vunpack.c.h.b16 %v805
    %v1093 = vunpack.c.l.b16 %v806
    %v1094 = vunpack.c.h.b16 %v806
    %v1095 = vunpack.c.l.b16 %v807
    %v1096 = vunpack.c.h.b16 %v807
    %v1097 = vunpack.c.l.b16 %v808
    %v1098 = vunpack.c.h.b16 %v808
    %v1099 = vunpack.c.l.b16 %v809
    %v1100 = vunpack.c.h.b16 %v809
    %v1101 = vunpack.c.l.b16 %v810
    %v1102 = vunpack.c.h.b16 %v810
    %v1103 = vunpack.c.l.b16 %v811
    %v1104 = vunpack.c.h.b16 %v811
    %v1105 = vunpack.c.l.b16 %v812
    %v1106 = vunpack.c.h.b16 %v812
    %v1107 = vunpack.c.l.b16 %v813
    %v1108 = vunpack.c.h.b16 %v813
    %v1109 = vunpack.c.l.b16 %v814
    %v1110 = vunpack.c.h.b16 %v814
    %v1111 = vunpack.c.l.b16 %v815
    %v1112 = vunpack.c.h.b16 %v815
    %v1113 = vunpack.c.l.b16 %v816
    %v1114 = vunpack.c.h.b16 %v816
    %v1115 = vunpack.c.l.b16 %v817
    %v1116 = vunpack.c.h.b16 %v817
    %v1117 = vunpack.c.l.b16 %v818
    %v1118 = vunpack.c.h.b16 %v818
    %v1119 = vunpack.c.l.b16 %v819
    %v1120 = vunpack.c.h.b16 %v819
    %v1121 = vunpack.c.l.b16 %v820
    %v1122 = vunpack.c.h.b16 %v820
    %v1123 = vunpack.c.l.b16 %v821
    %v1124 = vunpack.c.h.b16 %v821
    %v1125 = vunpack.c.l.b16 %v822
    %v1126 = vunpack.c.h.b16 %v822
    %v1127 = vunpack.c.l.b16 %v823
    %v1128 = vunpack.c.h.b16 %v823
    %v1129 = vunpack.c.l.b16 %v824
    %v1130 = vunpack.c.h.b16 %v824
    %v1131 = vunpack.c.l.b16 %v825
    %v1132 = vunpack.c.h.b16 %v825
    %v1133 = vunpack.c.l.b16 %v826
    %v1134 = vunpack.c.h.b16 %v826
    %v1135 = vunpack.c.l.b16 %v827
    %v1136 = vunpack.c.h.b16 %v827
    %v1137 = vunpack.c.l.b16 %v828
    %v1138 = vunpack.c.h.b16 %v828
    %v1139 = vunpack.c.l.b16 %v829
    %v1140 = vunpack.c.h.b16 %v829
    %v1141 = vunpack.c.l.b16 %v830
    %v1142 = vunpack.c.h.b16 %v830
    %v1143 = vunpack.c.l.b16 %v831
    %v1144 = vunpack.c.h.b16 %v831
    %v1145 = vunpack.c.l.b16 %v832
    %v1146 = vunpack.c.h.b16 %v832
    %v1147 = vunpack.c.l.b16 %v833
    %v1148 = vunpack.c.h.b16 %v833
    %v1149 = vunpack.c.l.b16 %v834
    %v1150 = vunpack.c.h.b16 %v834
    %v1151 = vunpack.c.l.b16 %v835
    %v1152 = vunpack.c.h.b16 %v835
    %v1153 = vunpack.c.l.b16 %v836
    %v1154 = vunpack.c.h.b16 %v836
    %v1155 = vunpack.c.l.b16 %v837
    %v1156 = vunpack.c.h.b16 %v837
    %v1157 = vunpack.c.l.b16 %v838
    %v1158 = vunpack.c.h.b16 %v838
    %v1159 = vunpack.c.l.b16 %v839
    %v1160 = vunpack.c.h.b16 %v839
    %v1161 = vunpack.c.l.b16 %v840
    %v1162 = vunpack.c.h.b16 %v840
    %v1163 = vunpack.c.l.b16 %v841
    %v1164 = vunpack.c.h.b16 %v841
    %v1165 = vunpack.c.l.b16 %v842
    %v1166 = vunpack.c.h.b16 %v842
    %v1167 = vunpack.c.l.b16 %v843
    %v1168 = vunpack.c.h.b16 %v843
    %v1169 = vunpack.c.l.b16 %v844
    %v1170 = vunpack.c.h.b16 %v844
    %v1171 = vunpack.c.l.b16 %v845
    %v1172 = vunpack.c.h.b16 %v845
    %v1173 = vunpack.c.l.b16 %v846
    %v1174 = vunpack.c.h.b16 %v846
    %v1175 = vunpack.c.l.b16 %v847
    %v1176 = vunpack.c.h.b16 %v847
    %v1177 = vunpack.c.l.b16 %v848
    %v1178 = vunpack.c.h.b16 %v848
    %v1179 = vunpack.c.l.b16 %v849
    %v1180 = vunpack.c.h.b16 %v849
    %v1181 = vunpack.c.l.b16 %v850
    %v1182 = vunpack.c.h.b16 %v850
    %v1183 = vunpack.c.l.b16 %v851
    %v1184 = vunpack.c.h.b16 %v851
    %v1185 = vunpack.c.l.b16 %v852
    %v1186 = vunpack.c.h.b16 %v852
    %v1187 = vunpack.c.l.b16 %v853
    %v1188 = vunpack.c.h.b16 %v853
    %v1189 = vunpack.c.l.b16 %v854
    %v1190 = vunpack.c.h.b16 %v854
    %v1191 = vunpack.c.l.b16 %v855
    %v1192 = vunpack.c.h.b16 %v855
    %v1193 = vunpack.c.l.b16 %v856
    %v1194 = vunpack.c.h.b16 %v856
    %v1195 = vunpack.c.l.b16 %v857
    %v1196 = vunpack.c.h.b16 %v857
    %v1197 = vunpack.c.l.b16 %v858
    %v1198 = vunpack.c.h.b16 %v858
    %v1199 = vunpack.c.l.b16 %v859
    %v1200 = vunpack.c.h.b16 %v859
    %v1201 = vunpack.c.l.b16 %v860
    %v1202 = vunpack.c.h.b16 %v860
    %v1203 = vunpack.c.l.b16 %v861
    %v1204 = vunpack.c.h.b16 %v861
    %v1205 = vunpack.c.l.b16 %v862
    %v1206 = vunpack.c.h.b16 %v862
    %v1207 = vunpack.c.l.b16 %v863
    %v1208 = vunpack.c.h.b16 %v863
    %v1209 = vunpack.c.l.b16 %v864
    %v1210 = vunpack.c.h.b16 %v864
    %v1211 = vunpack.c.l.b16 %v865
    %v1212 = vunpack.c.h.b16 %v865
    %v1213 = vunpack.c.l.b16 %v866
    %v1214 = vunpack.c.h.b16 %v866
    %v1215 = vunpack.c.l.b16 %v867
    %v1216 = vunpack.c.h.b16 %v867
    %v1217 = vunpack.c.l.b16 %v868
    %v1218 = vunpack.c.h.b16 %v868
    %v1219 = vunpack.c.l.b16 %v869
    %v1220 = vunpack.c.h.b16 %v869
    %v1221 = vunpack.c.l.b16 %v870
    %v1222 = vunpack.c.h.b16 %v870
    %v1223 = vunpack.c.l.b16 %v871
    %v1224 = vunpack.c.h.b16 %v871
    %v1225 = vunpack.c.l.b16 %v872
    %v1226 = vunpack.c.h.b16 %v872
    %v1227 = vunpack.c.l.b16 %v873
    %v1228 = vunpack.c.h.b16 %v873
    %v1229 = vunpack.c.l.b16 %v874
    %v1230 = vunpack.c.h.b16 %v874
    %v1231 = vunpack.c.l.b16 %v875
    %v1232 = vunpack.c.h.b16 %v875
    %v1233 = vunpack.c.l.b16 %v876
    %v1234 = vunpack.c.h.b16 %v876
    %v1235 = vunpack.c.l.b16 %v877
    %v1236 = vunpack.c.h.b16 %v877
    %v1237 = vunpack.c.l.b16 %v878
    %v1238 = vunpack.c.h.b16 %v878
    %v1239 = vunpack.c.l.b16 %v879
    %v1240 = vunpack.c.h.b16 %v879
    %v1241 = vunpack.c.l.b16 %v880
    %v1242 = vunpack.c.h.b16 %v880
    %v1243 = vunpack.c.l.b16 %v881
    %v1244 = vunpack.c.h.b16 %v881
    %v1245 = vunpack.c.l.b16 %v882
    %v1246 = vunpack.c.h.b16 %v882
    %v1247 = vunpack.c.l.b16 %v883
    %v1248 = vunpack.c.h.b16 %v883
    %v1249 = vunpack.c.l.b16 %v884
    %v1250 = vunpack.c.h.b16 %v884
    %v1251 = vunpack.c.l.b16 %v885
    %v1252 = vunpack.c.h.b16 %v885
    %v1253 = vunpack.c.l.b16 %v886
    %v1254 = vunpack.c.h.b16 %v886
    %v1255 = vunpack.c.l.b16 %v887
    %v1256 = vunpack.c.h.b16 %v887
    %v1257 = vunpack.c.l.b16 %v888
    %v1258 = vunpack.c.h.b16 %v888
    %v1259 = vunpack.c.l.b16 %v889
    %v1260 = vunpack.c.h.b16 %v889
    %v1261 = vunpack.c.l.b16 %v890
    %v1262 = vunpack.c.h.b16 %v890
    %v1263 = vunpack.c.l.b16 %v891
    %v1264 = vunpack.c.h.b16 %v891
    %v1265 = vunpack.c.l.b16 %v892
    %v1266 = vunpack.c.h.b16 %v892
    %v1267 = vunpack.c.l.b16 %v893
    %v1268 = vunpack.c.h.b16 %v893
    %v1269 = vunpack.c.l.b16 %v894
    %v1270 = vunpack.c.h.b16 %v894
    %v1271 = vunpack.c.l.b16 %v895
    %v1272 = vunpack.c.h.b16 %v895
    %v1273 = vunpack.c.l.b16 %v896
    %v1274 = vunpack.c.h.b16 %v896
    %v1275 = vunpack.c.l.b16 %v897
    %v1276 = vunpack.c.h.b16 %v897
    %v1277 = vunpack.c.l.b16 %v898
    %v1278 = vunpack.c.h.b16 %v898
    %v1279 = vunpack.c.l.b16 %v899
    %v1280 = vunpack.c.h.b16 %v899
    %v1281 = vunpack.c.l.b16 %v900
    %v1282 = vunpack.c.h.b16 %v900
    %v1283 = vunpack.c.l.b16 %v901
    %v1284 = vunpack.c.h.b16 %v901
    %v1285 = vunpack.c.l.b16 %v902
    %v1286 = vunpack.c.h.b16 %v902
    %v1287 = vunpack.c.l.b16 %v903
    %v1288 = vunpack.c.h.b16 %v903
    %v1289 = vunpack.c.l.b16 %v904
    %v1290 = vunpack.c.h.b16 %v904
    %v1291 = vunpack.c.l.b16 %v905
    %v1292 = vunpack.c.h.b16 %v905
    %v1293 = vunpack.c.l.b16 %v906
    %v1294 = vunpack.c.h.b16 %v906
    %v1295 = vunpack.c.l.b16 %v907
    %v1296 = vunpack.c.h.b16 %v907
    %v1297 = vunpack.c.l.b16 %v908
    %v1298 = vunpack.c.h.b16 %v908
    %v1299 = vunpack.c.l.b16 %v909
    %v1300 = vunpack.c.h.b16 %v909
    %v1301 = vunpack.c.l.b16 %v910
    %v1302 = vunpack.c.h.b16 %v910
    %v1303 = vunpack.c.l.b16 %v911
    %v1304 = vunpack.c.h.b16 %v911
    %v1305 = vunpack.c.l.b16 %v912
    %v1306 = vunpack.c.h.b16 %v912
    %v1307 = vunpack.c.l.b16 %v913
    %v1308 = vunpack.c.h.b16 %v913
    %v1309 = vunpack.c.l.b16 %v914
    %v1310 = vunpack.c.h.b16 %v914
    %v1311 = vunpack.c.l.b16 %v915
    %v1312 = vunpack.c.h.b16 %v915
    %v1313 = vunpack.c.l.b16 %v916
    %v1314 = vunpack.c.h.b16 %v916
    %v1315 = vunpack.c.l.b16 %v917
    %v1316 = vunpack.c.h.b16 %v917
    %v1317 = vunpack.c.l.b16 %v918
    %v1318 = vunpack.c.h.b16 %v918
    %v1319 = vunpack.c.l.b16 %v919
    %v1320 = vunpack.c.h.b16 %v919
    %v1321 = vunpack.c.l.b16 %v920
    %v1322 = vunpack.c.h.b16 %v920
    %v1323 = vunpack.c.l.b16 %v921
    %v1324 = vunpack.c.h.b16 %v921
    %v1325 = vunpack.c.l.b16 %v922
    %v1326 = vunpack.c.h.b16 %v922
    %v1327 = vunpack.c.l.b16 %v923
    %v1328 = vunpack.c.h.b16 %v923
    %v1329 = vunpack.c.l.b16 %v924
    %v1330 = vunpack.c.h.b16 %v924
    %v1331 = vpack.c.b16 %v1079, %v1075
    %v1332 = vpack.c.b16 %v1080, %v1076
    %v1333 = vpack.c.b16 %v1081, %v1077
    %v1334 = vpack.c.b16 %v1082, %v1078
    %v1335 = vpack.c.b16 %v1087, %v1083
    %v1336 = vpack.c.b16 %v1088, %v1084
    %v1337 = vpack.c.b16 %v1089, %v1085
    %v1338 = vpack.c.b16 %v1090, %v1086
    %v1339 = vpack.c.b16 %v1095, %v1091
    %v1340 = vpack.c.b16 %v1096, %v1092
    %v1341 = vpack.c.b16 %v1097, %v1093
    %v1342 = vpack.c.b16 %v1098, %v1094
    %v1343 = vpack.c.b16 %v1103, %v1099
    %v1344 = vpack.c.b16 %v1104, %v1100
    %v1345 = vpack.c.b16 %v1105, %v1101
    %v1346 = vpack.c.b16 %v1106, %v1102
    %v1347 = vpack.c.b16 %v1111, %v1107
    %v1348 = vpack.c.b16 %v1112, %v1108
    %v1349 = vpack.c.b16 %v1113, %v1109
    %v1350 = vpack.c.b16 %v1114, %v1110
    %v1351 = vpack.c.b16 %v1119, %v1115
    %v1352 = vpack.c.b16 %v1120, %v1116
    %v1353 = vpack.c.b16 %v1121, %v1117
    %v1354 = vpack.c.b16 %v1122, %v1118
    %v1355 = vpack.c.b16 %v1127, %v1123
    %v1356 = vpack.c.b16 %v1128, %v1124
    %v1357 = vpack.c.b16 %v1129, %v1125
    %v1358 = vpack.c.b16 %v1130, %v1126
    %v1359 = vpack.c.b16 %v1135, %v1131
    %v1360 = vpack.c.b16 %v1136, %v1132
    %v1361 = vpack.c.b16 %v1137, %v1133
    %v1362 = vpack.c.b16 %v1138, %v1134
    %v1363 = vpack.c.b16 %v1143, %v1139
    %v1364 = vpack.c.b16 %v1144, %v1140
    %v1365 = vpack.c.b16 %v1145, %v1141
    %v1366 = vpack.c.b16 %v1146, %v1142
    %v1367 = vpack.c.b16 %v1151, %v1147
    %v1368 = vpack.c.b16 %v1152, %v1148
    %v1369 = vpack.c.b16 %v1153, %v1149
    %v1370 = vpack.c.b16 %v1154, %v1150
    %v1371 = vpack.c.b16 %v1159, %v1155
    %v1372 = vpack.c.b16 %v1160, %v1156
    %v1373 = vpack.c.b16 %v1161, %v1157
    %v1374 = vpack.c.b16 %v1162, %v1158
    %v1375 = vpack.c.b16 %v1167, %v1163
    %v1376 = vpack.c.b16 %v1168, %v1164
    %v1377 = vpack.c.b16 %v1169, %v1165
    %v1378 = vpack.c.b16 %v1170, %v1166
    %v1379 = vpack.c.b16 %v1175, %v1171
    %v1380 = vpack.c.b16 %v1176, %v1172
    %v1381 = vpack.c.b16 %v1177, %v1173
    %v1382 = vpack.c.b16 %v1178, %v1174
    %v1383 = vpack.c.b16 %v1183, %v1179
    %v1384 = vpack.c.b16 %v1184, %v1180
    %v1385 = vpack.c.b16 %v1185, %v1181
    %v1386 = vpack.c.b16 %v1186, %v1182
    %v1387 = vpack.c.b16 %v1191, %v1187
    %v1388 = vpack.c.b16 %v1192, %v1188
    %v1389 = vpack.c.b16 %v1193, %v1189
    %v1390 = vpack.c.b16 %v1194, %v1190
    %v1391 = vpack.c.b16 %v1199, %v1195
    %v1392 = vpack.c.b16 %v1200, %v1196
    %v1393 = vpack.c.b16 %v1201, %v1197
    %v1394 = vpack.c.b16 %v1202, %v1198
    %v1395 = vpack.c.b16 %v1207, %v1203
    %v1396 = vpack.c.b16 %v1208, %v1204
    %v1397 = vpack.c.b16 %v1209, %v1205
    %v1398 = vpack.c.b16 %v1210, %v1206
    %v1399 = vpack.c.b16 %v1215, %v1211
    %v1400 = vpack.c.b16 %v1216, %v1212
    %v1401 = vpack.c.b16 %v1217, %v1213
    %v1402 = vpack.c.b16 %v1218, %v1214
    %v1403 = vpack.c.b16 %v1223, %v1219
    %v1404 = vpack.c.b16 %v1224, %v1220
    %v1405 = vpack.c.b16 %v1225, %v1221
    %v1406 = vpack.c.b16 %v1226, %v1222
    %v1407 = vpack.c.b16 %v1231, %v1227
    %v1408 = vpack.c.b16 %v1232, %v1228
    %v1409 = vpack.c.b16 %v1233, %v1229
    %v1410 = vpack.c.b16 %v1234, %v1230
    %v1411 = vpack.c.b16 %v1239, %v1235
    %v1412 = vpack.c.b16 %v1240, %v1236
    %v1413 = vpack.c.b16 %v1241, %v1237
    %v1414 = vpack.c.b16 %v1242, %v1238
    %v1415 = vpack.c.b16 %v1247, %v1243
    %v1416 = vpack.c.b16 %v1248, %v1244
    %v1417 = vpack.c.b16 %v1249, %v1245
    %v1418 = vpack.c.b16 %v1250, %v1246
    %v1419 = vpack.c.b16 %v1255, %v1251
    %v1420 = vpack.c.b16 %v1256, %v1252
    %v1421 = vpack.c.b16 %v1257, %v1253
    %v1422 = vpack.c.b16 %v1258, %v1254
    %v1423 = vpack.c.b16 %v1263, %v1259
    %v1424 = vpack.c.b16 %v1264, %v1260
    %v1425 = vpack.c.b16 %v1265, %v1261
    %v1426 = vpack.c.b16 %v1266, %v1262
    %v1427 = vpack.c.b16 %v1271, %v1267
    %v1428 = vpack.c.b16 %v1272, %v1268
    %v1429 = vpack.c.b16 %v1273, %v1269
    %v1430 = vpack.c.b16 %v1274, %v1270
    %v1431 = vpack.c.b16 %v1279, %v1275
    %v1432 = vpack.c.b16 %v1280, %v1276
    %v1433 = vpack.c.b16 %v1281, %v1277
    %v1434 = vpack.c.b16 %v1282, %v1278
    %v1435 = vpack.c.b16 %v1287, %v1283
    %v1436 = vpack.c.b16 %v1288, %v1284
    %v1437 = vpack.c.b16 %v1289, %v1285
    %v1438 = vpack.c.b16 %v1290, %v1286
    %v1439 = vpack.c.b16 %v1295, %v1291
    %v1440 = vpack.c.b16 %v1296, %v1292
    %v1441 = vpack.c.b16 %v1297, %v1293
    %v1442 = vpack.c.b16 %v1298, %v1294
    %v1443 = vpack.c.b16 %v1303, %v1299
    %v1444 = vpack.c.b16 %v1304, %v1300
    %v1445 = vpack.c.b16 %v1305, %v1301
    %v1446 = vpack.c.b16 %v1306, %v1302
    %v1447 = vpack.c.b16 %v1311, %v1307
    %v1448 = vpack.c.b16 %v1312, %v1308
    %v1449 = vpack.c.b16 %v1313, %v1309
    %v1450 = vpack.c.b16 %v1314, %v1310
    %v1451 = vpack.c.b16 %v1319, %v1315
    %v1452 = vpack.c.b16 %v1320, %v1316
    %v1453 = vpack.c.b16 %v1321, %v1317
    %v1454 = vpack.c.b16 %v1322, %v1318
    %v1455 = vpack.c.b16 %v1327, %v1323
    %v1456 = vpack.c.b16 %v1328, %v1324
    %v1457 = vpack.c.b16 %v1329, %v1325
    %v1458 = vpack.c.b16 %v1330, %v1326
    %1587 = vmatprep.subr.bf16.mxu0 %v1332
    %1588 = vmatpush1.bf16.msra.mxu0 %v1331
    %1589 = vmatprep.subr.bf16.mxu0 %v1336
    %1590 = vmatpush1.bf16.msra.mxu0 %v1335
    %1591 = vmatprep.subr.bf16.mxu0 %v1340
    %1592 = vmatpush1.bf16.msra.mxu0 %v1339
    %1593 = vmatprep.subr.bf16.mxu0 %v1344
    %1594 = vmatpush1.bf16.msra.mxu0 %v1343
    %1595 = vmatprep.subr.bf16.mxu0 %v1348
    %1596 = vmatpush1.bf16.msra.mxu0 %v1347
    %1597 = vmatprep.subr.bf16.mxu0 %v1352
    %1598 = vmatpush1.bf16.msra.mxu0 %v1351
    %1599 = vmatprep.subr.bf16.mxu0 %v1356
    %1600 = vmatpush1.bf16.msra.mxu0 %v1355
    %1601 = vmatprep.subr.bf16.mxu0 %v1360
    %1602 = vmatpush1.bf16.msra.mxu0 %v1359
    %1603 = vmatprep.subr.bf16.mxu0 %v1364
    %1604 = vmatpush1.bf16.msra.mxu0 %v1363
    %1605 = vmatprep.subr.bf16.mxu0 %v1368
    %1606 = vmatpush1.bf16.msra.mxu0 %v1367
    %1607 = vmatprep.subr.bf16.mxu0 %v1372
    %1608 = vmatpush1.bf16.msra.mxu0 %v1371
    %1609 = vmatprep.subr.bf16.mxu0 %v1376
    %1610 = vmatpush1.bf16.msra.mxu0 %v1375
    %1611 = vmatprep.subr.bf16.mxu0 %v1380
    %1612 = vmatpush1.bf16.msra.mxu0 %v1379
    %1613 = vmatprep.subr.bf16.mxu0 %v1384
    %1614 = vmatpush1.bf16.msra.mxu0 %v1383
    %1615 = vmatprep.subr.bf16.mxu0 %v1388
    %1616 = vmatpush1.bf16.msra.mxu0 %v1387
    %1617 = vmatprep.subr.bf16.mxu0 %v1392
    %1618 = vmatpush1.bf16.msra.mxu0 %v1391
    %1619 = vmatprep.mubr.bf16.mxu0 %v794
    %1620 = vmatmul.mubr.bf16.gmra.mrb[0].mxu0 %v793
    %v1621 = vpop.f32.mrb[0].mxu0
    %v1622 = vadd.f32 %v930, %v1621
    %v1623 = vpop.f32.mrb[0].mxu0
    %v1624 = vadd.f32 %v934, %v1623
    %v1625 = vpop.f32.mrb[0].mxu0
    %v1626 = vadd.f32 %v930, %v1625
    %v1627 = vpop.f32.mrb[0].mxu0
    %v1628 = vadd.f32 %v934, %v1627
    %1629 = vdwg.mxu0
    %1630 = vmatprep.subr.bf16.mxu0 %v1396
    %1631 = vmatpush1.bf16.msra.mxu0 %v1395
    %1632 = vmatprep.subr.bf16.mxu0 %v1400
    %1633 = vmatpush1.bf16.msra.mxu0 %v1399
    %1634 = vmatprep.subr.bf16.mxu0 %v1404
    %1635 = vmatpush1.bf16.msra.mxu0 %v1403
    %1636 = vmatprep.subr.bf16.mxu0 %v1408
    %1637 = vmatpush1.bf16.msra.mxu0 %v1407
    %1638 = vmatprep.subr.bf16.mxu0 %v1412
    %1639 = vmatpush1.bf16.msra.mxu0 %v1411
    %1640 = vmatprep.subr.bf16.mxu0 %v1416
    %1641 = vmatpush1.bf16.msra.mxu0 %v1415
    %1642 = vmatprep.subr.bf16.mxu0 %v1420
    %1643 = vmatpush1.bf16.msra.mxu0 %v1419
    %1644 = vmatprep.subr.bf16.mxu0 %v1424
    %1645 = vmatpush1.bf16.msra.mxu0 %v1423
    %1646 = vmatprep.subr.bf16.mxu0 %v1428
    %1647 = vmatpush1.bf16.msra.mxu0 %v1427
    %1648 = vmatprep.subr.bf16.mxu0 %v1432
    %1649 = vmatpush1.bf16.msra.mxu0 %v1431
    %1650 = vmatprep.subr.bf16.mxu0 %v1436
    %1651 = vmatpush1.bf16.msra.mxu0 %v1435
    %1652 = vmatprep.subr.bf16.mxu0 %v1440
    %1653 = vmatpush1.bf16.msra.mxu0 %v1439
    %1654 = vmatprep.subr.bf16.mxu0 %v1444
    %1655 = vmatpush1.bf16.msra.mxu0 %v1443
    %1656 = vmatprep.subr.bf16.mxu0 %v1448
    %1657 = vmatpush1.bf16.msra.mxu0 %v1447
    %1658 = vmatprep.subr.bf16.mxu0 %v1452
    %1659 = vmatpush1.bf16.msra.mxu0 %v1451
    %1660 = vmatprep.subr.bf16.mxu0 %v1456
    %1661 = vmatpush1.bf16.msra.mxu0 %v1455
    %1662 = vmatprep.mubr.bf16.mxu0 %v796
    %1663 = vmatmul.mubr.bf16.gmra.mrb[0].mxu0 %v795
    %v1664 = vpop.f32.mrb[0].mxu0
    %v1665 = vadd.f32 %v1622, %v1664
    %v1666 = vpop.f32.mrb[0].mxu0
    %v1667 = vadd.f32 %v1624, %v1666
    %v1668 = vpop.f32.mrb[0].mxu0
    %v1669 = vadd.f32 %v1626, %v1668
    %v1670 = vpop.f32.mrb[0].mxu0
    %v1671 = vadd.f32 %v1628, %v1670
    %1672 = vdwg.mxu0
    %1673 = vmatprep.subr.bf16.mxu0 %v1334
    %1674 = vmatpush1.bf16.msra.mxu0 %v1333
    %1675 = vmatprep.subr.bf16.mxu0 %v1338
    %1676 = vmatpush1.bf16.msra.mxu0 %v1337
    %1677 = vmatprep.subr.bf16.mxu0 %v1342
    %1678 = vmatpush1.bf16.msra.mxu0 %v1341
    %1679 = vmatprep.subr.bf16.mxu0 %v1346
    %1680 = vmatpush1.bf16.msra.mxu0 %v1345
    %1681 = vmatprep.subr.bf16.mxu0 %v1350
    %1682 = vmatpush1.bf16.msra.mxu0 %v1349
    %1683 = vmatprep.subr.bf16.mxu0 %v1354
    %1684 = vmatpush1.bf16.msra.mxu0 %v1353
    %1685 = vmatprep.subr.bf16.mxu0 %v1358
    %1686 = vmatpush1.bf16.msra.mxu0 %v1357
    %1687 = vmatprep.subr.bf16.mxu0 %v1362
    %1688 = vmatpush1.bf16.msra.mxu0 %v1361
    %1689 = vmatprep.subr.bf16.mxu0 %v1366
    %1690 = vmatpush1.bf16.msra.mxu0 %v1365
    %1691 = vmatprep.subr.bf16.mxu0 %v1370
    %1692 = vmatpush1.bf16.msra.mxu0 %v1369
    %1693 = vmatprep.subr.bf16.mxu0 %v1374
    %1694 = vmatpush1.bf16.msra.mxu0 %v1373
    %1695 = vmatprep.subr.bf16.mxu0 %v1378
    %1696 = vmatpush1.bf16.msra.mxu0 %v1377
    %1697 = vmatprep.subr.bf16.mxu0 %v1382
    %1698 = vmatpush1.bf16.msra.mxu0 %v1381
    %1699 = vmatprep.subr.bf16.mxu0 %v1386
    %1700 = vmatpush1.bf16.msra.mxu0 %v1385
    %1701 = vmatprep.subr.bf16.mxu0 %v1390
    %1702 = vmatpush1.bf16.msra.mxu0 %v1389
    %1703 = vmatprep.subr.bf16.mxu0 %v1394
    %1704 = vmatpush1.bf16.msra.mxu0 %v1393
    %1705 = vmatprep.mubr.bf16.mxu0 %v794
    %1706 = vmatmul.mubr.bf16.gmra.mrb[0].mxu0 %v793
    %v1707 = vpop.f32.mrb[0].mxu0
    %v1708 = vadd.f32 %v938, %v1707
    %v1709 = vpop.f32.mrb[0].mxu0
    %v1710 = vadd.f32 %v942, %v1709
    %v1711 = vpop.f32.mrb[0].mxu0
    %v1712 = vadd.f32 %v938, %v1711
    %v1713 = vpop.f32.mrb[0].mxu0
    %v1714 = vadd.f32 %v942, %v1713
    %1715 = vdwg.mxu0
    %1716 = vmatprep.subr.bf16.mxu0 %v1398
    %1717 = vmatpush1.bf16.msra.mxu0 %v1397
    %1718 = vmatprep.subr.bf16.mxu0 %v1402
    %1719 = vmatpush1.bf16.msra.mxu0 %v1401
    %1720 = vmatprep.subr.bf16.mxu0 %v1406
    %1721 = vmatpush1.bf16.msra.mxu0 %v1405
    %1722 = vmatprep.subr.bf16.mxu0 %v1410
    %1723 = vmatpush1.bf16.msra.mxu0 %v1409
    %1724 = vmatprep.subr.bf16.mxu0 %v1414
    %1725 = vmatpush1.bf16.msra.mxu0 %v1413
    %1726 = vmatprep.subr.bf16.mxu0 %v1418
    %1727 = vmatpush1.bf16.msra.mxu0 %v1417
    %1728 = vmatprep.subr.bf16.mxu0 %v1422
    %1729 = vmatpush1.bf16.msra.mxu0 %v1421
    %1730 = vmatprep.subr.bf16.mxu0 %v1426
    %1731 = vmatpush1.bf16.msra.mxu0 %v1425
    %1732 = vmatprep.subr.bf16.mxu0 %v1430
    %1733 = vmatpush1.bf16.msra.mxu0 %v1429
    %1734 = vmatprep.subr.bf16.mxu0 %v1434
    %1735 = vmatpush1.bf16.msra.mxu0 %v1433
    %1736 = vmatprep.subr.bf16.mxu0 %v1438
    %1737 = vmatpush1.bf16.msra.mxu0 %v1437
    %1738 = vmatprep.subr.bf16.mxu0 %v1442
    %1739 = vmatpush1.bf16.msra.mxu0 %v1441
    %1740 = vmatprep.subr.bf16.mxu0 %v1446
    %1741 = vmatpush1.bf16.msra.mxu0 %v1445
    %1742 = vmatprep.subr.bf16.mxu0 %v1450
    %1743 = vmatpush1.bf16.msra.mxu0 %v1449
    %1744 = vmatprep.subr.bf16.mxu0 %v1454
    %1745 = vmatpush1.bf16.msra.mxu0 %v1453
    %1746 = vmatprep.subr.bf16.mxu0 %v1458
    %1747 = vmatpush1.bf16.msra.mxu0 %v1457
    %1748 = vmatprep.mubr.bf16.mxu0 %v796
    %1749 = vmatmul.mubr.bf16.gmra.mrb[0].mxu0 %v795
    %v1750 = vpop.f32.mrb[0].mxu0
    %v1751 = vadd.f32 %v1708, %v1750
    %v1752 = vpop.f32.mrb[0].mxu0
    %v1753 = vadd.f32 %v1710, %v1752
    %v1754 = vpop.f32.mrb[0].mxu0
    %v1755 = vadd.f32 %v1712, %v1754
    %v1756 = vpop.f32.mrb[0].mxu0
    %v1757 = vadd.f32 %v1714, %v1756
    %1758 = vdwg.mxu0
    %v1759 = vtanh.pop %v1665
    %v1760 = vtanh.pop %v1667
    %v1761 = vtanh.pop %v1751
    %v1762 = vtanh.pop %v1753
    %v1763 = vtanh.pop %v1669
    %v1764 = vtanh.pop %v1671
    %v1765 = vtanh.pop %v1755
    %v1766 = vtanh.pop %v1757
    %v1767 = vld [vmem:[%s1] sm:$0xff]
    %v1768 = vld [vmem:[%s1 + $0x8] sm:$0xff]
    %v1769 = vld [vmem:[%s1 + $0x10] sm:$0xff]
    %v1770 = vld [vmem:[%s1 + $0x18] sm:$0xff]
    %v1771 = vmul.f32 %v1761, 0.5
    %v1772 = vmul.f32 %v1762, 0.5
    %v1773 = vmul.f32 %v1765, 0.5
    %v1774 = vmul.f32 %v1766, 0.5
    %v1775 = vmul.f32 %v1771, 1.442695
    %v1776 = vpow.pop %v1775
    %v1777 = vmul.f32 %v1772, 1.442695
    %v1778 = vpow.pop %v1777
    %v1779 = vmul.f32 %v1773, 1.442695
    %v1780 = vpow.pop %v1779
    %v1781 = vmul.f32 %v1774, 1.442695
    %v1782 = vpow.pop %v1781
    %v1783 = vmul.f32 %v1767, %v1776
    %v1784 = vmul.f32 %v1768, %v1778
    %v1785 = vmul.f32 %v1769, %v1780
    %v1786 = vmul.f32 %v1770, %v1782
    %v1787 = vadd.f32 %v1759, %v1783
    %v1788 = vadd.f32 %v1760, %v1784
    %v1789 = vadd.f32 %v1763, %v1785
    %v1790 = vadd.f32 %v1764, %v1786
    %1791 = vst [vmem:[#allocation2] sm:$0xff] %v1787
    %1792 = vst [vmem:[#allocation2 + $0x8] sm:$0xff] %v1788
    %1793 = vst [vmem:[#allocation2 + $0x10] sm:$0xff] %v1789
    %1794 = vst [vmem:[#allocation2 + $0x18] sm:$0xff] %v1790
    %1795 = vst [vmem:[#allocation4] sm:$0xff] %v1759
    %1796 = vst [vmem:[#allocation4 + $0x8] sm:$0xff] %v1760
    %1797 = vst [vmem:[#allocation4 + $0x10] sm:$0xff] %v1763
    %1798 = vst [vmem:[#allocation4 + $0x18] sm:$0xff] %v1764
    %1799 = vst [vmem:[#allocation6] sm:$0xff] %v1761
    %1800 = vst [vmem:[#allocation6 + $0x8] sm:$0xff] %v1762
    %1801 = vst [vmem:[#allocation6 + $0x10] sm:$0xff] %v1765
    %1802 = vst [vmem:[#allocation6 + $0x18] sm:$0xff] %v1766
    // Predicated region
    $region34: #{prior_network_forward.1} parent=1 // pred_check
      _
    $region35: #{prior_network_forward.1} parent=1 // pred_check_branch
      %1804 = sbr.rel (0) target = $region37
    $region36: #{prior_network_forward.1} parent=1 // pred_region
      %s1806 = ssub.s32 512, 512
      %1807 = vsyncadd [#allocation3], %s1806
      %s1808 = sshll.u32 [#allocation2], 4
      %s1809 = int_to_ptr.vmem [resolvable:$true] %s1808
      %1814 = dma.vmem_to_hbm [thread:$0]  %s1809, 512, %s8, [#allocation3], 256, 256, 16
    $region37: #{prior_network_forward.1} parent=1 // pred_fallthru
      _
    // Predicated region
    $region38: #{prior_network_forward.1} parent=1 // pred_check
      _
    $region39: #{prior_network_forward.1} parent=1 // pred_check_branch
      %1816 = sbr.rel (0) target = $region41
    $region40: #{prior_network_forward.1} parent=1 // pred_region
      %s1818 = ssub.s32 512, 512
      %1819 = vsyncadd [#allocation5], %s1818
      %s1820 = sshll.u32 [#allocation4], 4
      %s1821 = int_to_ptr.vmem [resolvable:$true] %s1820
      %1826 = dma.vmem_to_hbm [thread:$0]  %s1821, 512, %s9, [#allocation5], 256, 256, 16
    $region41: #{prior_network_forward.1} parent=1 // pred_fallthru
      _
    // Predicated region
    $region42: #{prior_network_forward.1} parent=1 // pred_check
      _
    $region43: #{prior_network_forward.1} parent=1 // pred_check_branch
      %1828 = sbr.rel (0) target = $region45
    $region44: #{prior_network_forward.1} parent=1 // pred_region
      %s1830 = ssub.s32 512, 512
      %1831 = vsyncadd [#allocation5], %s1830
      %s1832 = sshll.u32 [#allocation6], 4
      %s1833 = int_to_ptr.vmem [resolvable:$true] %s1832
      %1838 = dma.vmem_to_hbm [thread:$0]  %s1833, 512, %s10, [#allocation5], 256, 256, 16
    $region45: #{prior_network_forward.1} parent=1 // pred_fallthru
      _
    // Predicated region
    $region46: #{prior_network_forward.1} parent=1 // pred_check
      _
    $region47: #{prior_network_forward.1} parent=1 // pred_check_branch
      %1840 = sbr.rel (0) target = $region49
    $region48: #{prior_network_forward.1} parent=1 // pred_region
      %1841 = dma.done [#allocation3], 512
    $region49: #{prior_network_forward.1} parent=1 // pred_fallthru
      _
    // Predicated region
    $region50: #{prior_network_forward.1} parent=1 // pred_check
      _
    $region51: #{prior_network_forward.1} parent=1 // pred_check_branch
      %1843 = sbr.rel (0) target = $region53
    $region52: #{prior_network_forward.1} parent=1 // pred_region
      %1844 = dma.done [#allocation5], 512
    $region53: #{prior_network_forward.1} parent=1 // pred_fallthru
      _
    // Predicated region
    $region54: #{prior_network_forward.1} parent=1 // pred_check
      _
    $region55: #{prior_network_forward.1} parent=1 // pred_check_branch
      %1846 = sbr.rel (0) target = $region57
    $region56: #{prior_network_forward.1} parent=1 // pred_region
      %1847 = dma.done [#allocation5], 512
    $region57: #{prior_network_forward.1} parent=1 // pred_fallthru
      _
    %1848 = vsyncpa [#allocation3], 1
    %1849 = vsyncpa [#allocation5], 1

</llo_original>
